<compile_context>
chip_gen: v7x
topology: tpu7x:2x2x1
jax: 0.10.0
libtpu: 0.0.40
codegen_flags: <defaults>
</compile_context>

<pallas_src>
import jax
import jax.numpy as jnp
from jax.experimental import pallas as pl
from jax.experimental.pallas import tpu as pltpu


def _round_up(n: int, m: int) -> int:
    return ((n + m - 1) // m) * m


def ofdm_mlp_kernel(x_ref,
                    w1_ref, b1_ref,
                    w2_ref, b2_ref,
                    w3_ref, b3_ref,
                    w4_ref, b4_ref,
                    o_ref):
    # One batch tile; bf16 matmuls on the MXU with f32 accumulation,
    # bias-add / ReLU / sigmoid in f32 on the VPU / EUP.
    x = x_ref[...]  # (tile, in_pad) bf16

    h1 = jnp.dot(x, w1_ref[...], preferred_element_type=jnp.float32) + b1_ref[...]
    h1 = jnp.maximum(h1, 0.0).astype(jnp.bfloat16)

    h2 = jnp.dot(h1, w2_ref[...], preferred_element_type=jnp.float32) + b2_ref[...]
    h2 = jnp.maximum(h2, 0.0).astype(jnp.bfloat16)

    h3 = jnp.dot(h2, w3_ref[...], preferred_element_type=jnp.float32) + b3_ref[...]
    h3 = jnp.maximum(h3, 0.0).astype(jnp.bfloat16)

    logits = jnp.dot(h3, w4_ref[...], preferred_element_type=jnp.float32) + b4_ref[...]
    o_ref[...] = jax.nn.sigmoid(logits).astype(o_ref.dtype)


def ofdm_net_forward(x, padded_params, *, n_output=16, batch_tile=128):
    """Pallas implementation of OFDMNet.forward.

    x:             (B, input_size) float32 (or bf16)
    padded_params: dict w1..w4 (in_pad, out_pad) bf16, b1..b4 (1, out_pad) f32,
                   all dims already padded to multiples of 128 (see
                   pad_params_for_tpu).
    Returns (B, n_output) float32.
    """
    w1, b1 = padded_params["w1"], padded_params["b1"]
    w2, b2 = padded_params["w2"], padded_params["b2"]
    w3, b3 = padded_params["w3"], padded_params["b3"]
    w4, b4 = padded_params["w4"], padded_params["b4"]

    in_pad = w1.shape[0]
    h1p, h2p, h3p = w1.shape[1], w2.shape[1], w3.shape[1]
    out_pad = w4.shape[1]

    B, in_dim = x.shape
    x = x.astype(jnp.bfloat16)
    if in_dim != in_pad:                       # zero-pad feature lanes (exact)
        x = jnp.pad(x, ((0, 0), (0, in_pad - in_dim)))

    # Large MXU-friendly batch tile; for small B shrink the tile instead of
    # forcing callers into tiny tiles (no hard divisibility assert).
    eff_tile = min(batch_tile, _round_up(B, 8))
    b_pad = _round_up(B, eff_tile)
    if b_pad != B:                             # zero-pad batch rows, slice later
        x = jnp.pad(x, ((0, b_pad - B), (0, 0)))
    grid = (b_pad // eff_tile,)

    # Advisory cost estimate for the XLA scheduler.
    flops = 2 * b_pad * (in_pad * h1p + h1p * h2p + h2p * h3p + h3p * out_pad)
    weight_bytes = sum(int(w.size) * 2 for w in (w1, w2, w3, w4))
    bias_bytes = sum(int(b.size) * 4 for b in (b1, b2, b3, b4))
    bytes_accessed = (b_pad * in_pad * 2          # x (bf16)
                      + weight_bytes + bias_bytes
                      + b_pad * out_pad * 4)      # output (f32)
    cost = pl.CostEstimate(flops=flops,
                           transcendentals=b_pad * out_pad,   # sigmoid exp
                           bytes_accessed=bytes_accessed)

    def full(shape):
        # Resident block: same block index for every grid step.
        return pl.BlockSpec(shape, lambda i: (0, 0))

    out = pl.pallas_call(
        ofdm_mlp_kernel,
        out_shape=jax.ShapeDtypeStruct((b_pad, out_pad), jnp.float32),
        grid_spec=pltpu.PrefetchScalarGridSpec(
            num_scalar_prefetch=0,
            grid=grid,
            in_specs=[
                pl.BlockSpec((eff_tile, in_pad), lambda i: (i, 0)),
                full(w1.shape), full(b1.shape),
                full(w2.shape), full(b2.shape),
                full(w3.shape), full(b3.shape),
                full(w4.shape), full(b4.shape),
            ],
            out_specs=pl.BlockSpec((eff_tile, out_pad), lambda i: (i, 0)),
        ),
        compiler_params=pltpu.CompilerParams(
            dimension_semantics=("parallel",),   # shards across TCs on v7x
        ),
        cost_estimate=cost,
    )(x, w1, b1, w2, b2, w3, b3, w4, b4)

    return out[:B, :n_output]


def init_params(key, input_size, n_hidden_1=500, n_hidden_2=250,
                n_hidden_3=120, n_output=16):
    """Logical (unpadded, f32) params mimicking nn.Linear's U(-1/sqrt(fan_in))
    init; weights stored pre-transposed as (in, out) so forward is x @ W + b."""
    dims = [(input_size, n_hidden_1),
            (n_hidden_1, n_hidden_2),
            (n_hidden_2, n_hidden_3),
            (n_hidden_3, n_output)]
    params = {}
    for idx, (fan_in, fan_out) in enumerate(dims, start=1):
        key, kw, kb = jax.random.split(key, 3)
        bound = 1.0 / jnp.sqrt(jnp.float32(fan_in))
        params[f"w{idx}"] = jax.random.uniform(
            kw, (fan_in, fan_out), jnp.float32, -bound, bound)
        params[f"b{idx}"] = jax.random.uniform(
            kb, (1, fan_out), jnp.float32, -bound, bound)
    return params


def pad_params_for_tpu(params):
    """One-time padding of every dim to a multiple of 128; weights -> bf16,
    biases stay f32. Zero padding is exact through the matmuls and ReLU; the
    padded output lanes are sliced away by the wrapper."""
    padded = {}
    for idx in range(1, 5):
        w = params[f"w{idx}"]
        b = params[f"b{idx}"]
        fi, fo = w.shape
        fi_p, fo_p = _round_up(fi, 128), _round_up(fo, 128)
        wp = jnp.zeros((fi_p, fo_p), jnp.bfloat16).at[:fi, :fo].set(
            w.astype(jnp.bfloat16))
        bp = jnp.zeros((1, fo_p), jnp.float32).at[:, :fo].set(b)
        padded[f"w{idx}"] = wp
        padded[f"b{idx}"] = bp
    return padded


def reference_forward(x, params):
    """Pure-JAX reference mirroring the kernel math (bf16 inputs/weights,
    f32 accumulation) on the unpadded parameters."""
    h = x.astype(jnp.bfloat16)
    for idx in (1, 2, 3):
        w = params[f"w{idx}"].astype(jnp.bfloat16)
        h = jnp.dot(h, w, preferred_element_type=jnp.float32) + params[f"b{idx}"]
        h = jnp.maximum(h, 0.0).astype(jnp.bfloat16)
    w4 = params["w4"].astype(jnp.bfloat16)
    logits = jnp.dot(h, w4, preferred_element_type=jnp.float32) + params["b4"]
    return jax.nn.sigmoid(logits)


if __name__ == "__main__":
    key = jax.random.PRNGKey(0)
    input_size = 256   # e.g. 2 * 128 subcarriers (real/imag interleaved)
    batch = 200        # not a multiple of the tile -> exercises batch padding

    key, kx, kp = jax.random.split(key, 3)
    x = jax.random.normal(kx, (batch, input_size), jnp.float32)
    params = init_params(kp, input_size)
    padded_params = pad_params_for_tpu(params)

    out = ofdm_net_forward(x, padded_params, n_output=16, batch_tile=128)
    out = jax.block_until_ready(out)

    ref = reference_forward(x, params)
    assert out.shape == (batch, 16)
    assert jnp.allclose(out, ref, atol=1e-3, rtol=1e-3), "mismatch vs reference"

    print("KERNEL_OK")
</pallas_src>

<mosaic_0001>
module attributes {stable_mosaic.version = 11 : i64} {
  func.func @ofdm_mlp_kernel(%arg0: i32, %arg1: memref<128x256xbf16, #tpu.memory_space<vmem>>, %arg2: memref<256x512xbf16, #tpu.memory_space<vmem>>, %arg3: memref<1x512xf32, #tpu.memory_space<vmem>>, %arg4: memref<512x256xbf16, #tpu.memory_space<vmem>>, %arg5: memref<1x256xf32, #tpu.memory_space<vmem>>, %arg6: memref<256x128xbf16, #tpu.memory_space<vmem>>, %arg7: memref<1x128xf32, #tpu.memory_space<vmem>>, %arg8: memref<128x128xbf16, #tpu.memory_space<vmem>>, %arg9: memref<1x128xf32, #tpu.memory_space<vmem>>, %arg10: memref<128x128xf32, #tpu.memory_space<vmem>>) attributes {dimension_semantics = [#tpu.dimension_semantics<parallel>], iteration_bounds = array<i64: 2>, scalar_prefetch = 0 : i64, scratch_operands = 0 : i64, tpu.core_type = #tpu.core_type<tc>, window_params = [{transform_indices = @transform_0, window_bounds = array<i64: 128, 256>}, {pipeline_mode = #tpu.pipeline_mode<synchronous>, transform_indices = @transform_1, window_bounds = array<i64: 256, 512>}, {pipeline_mode = #tpu.pipeline_mode<synchronous>, transform_indices = @transform_2, window_bounds = array<i64: 1, 512>}, {pipeline_mode = #tpu.pipeline_mode<synchronous>, transform_indices = @transform_3, window_bounds = array<i64: 512, 256>}, {pipeline_mode = #tpu.pipeline_mode<synchronous>, transform_indices = @transform_4, window_bounds = array<i64: 1, 256>}, {pipeline_mode = #tpu.pipeline_mode<synchronous>, transform_indices = @transform_5, window_bounds = array<i64: 256, 128>}, {pipeline_mode = #tpu.pipeline_mode<synchronous>, transform_indices = @transform_6, window_bounds = array<i64: 1, 128>}, {pipeline_mode = #tpu.pipeline_mode<synchronous>, transform_indices = @transform_7, window_bounds = array<i64: 128, 128>}, {pipeline_mode = #tpu.pipeline_mode<synchronous>, transform_indices = @transform_8, window_bounds = array<i64: 1, 128>}, {transform_indices = @transform_9, window_bounds = array<i64: 128, 128>}]} {
    %c0 = arith.constant 0 : index
    %c0_0 = arith.constant 0 : index
    %0 = vector.load %arg1[%c0, %c0_0] : memref<128x256xbf16, #tpu.memory_space<vmem>>, vector<128x256xbf16>
    %c0_1 = arith.constant 0 : index
    %c0_2 = arith.constant 0 : index
    %1 = vector.load %arg2[%c0_1, %c0_2] : memref<256x512xbf16, #tpu.memory_space<vmem>>, vector<256x512xbf16>
    %cst = arith.constant dense<0.000000e+00> : vector<128x512xf32>
    %2 = tpu.matmul %0, %1, %cst {dimension_numbers = #tpu.dot_dimension_numbers<[1], [0], [0], [1], [0, 0, 1, 1], [], []>} : vector<128x256xbf16>, vector<256x512xbf16>, vector<128x512xf32> -> vector<128x512xf32>
    %c0_3 = arith.constant 0 : index
    %c0_4 = arith.constant 0 : index
    %3 = vector.load %arg3[%c0_3, %c0_4] : memref<1x512xf32, #tpu.memory_space<vmem>>, vector<1x512xf32>
    %4 = vector.broadcast %3 : vector<1x512xf32> to vector<128x512xf32>
    %5 = arith.addf %2, %4 : vector<128x512xf32>
    %cst_5 = arith.constant 0.000000e+00 : f32
    %6 = vector.broadcast %cst_5 : f32 to vector<128x512xf32>
    %7 = arith.maximumf %5, %6 : vector<128x512xf32>
    %8 = arith.truncf %7 : vector<128x512xf32> to vector<128x512xbf16>
    %c0_6 = arith.constant 0 : index
    %c0_7 = arith.constant 0 : index
    %9 = vector.load %arg4[%c0_6, %c0_7] : memref<512x256xbf16, #tpu.memory_space<vmem>>, vector<512x256xbf16>
    %cst_8 = arith.constant dense<0.000000e+00> : vector<128x256xf32>
    %10 = tpu.matmul %8, %9, %cst_8 {dimension_numbers = #tpu.dot_dimension_numbers<[1], [0], [0], [1], [0, 0, 1, 1], [], []>} : vector<128x512xbf16>, vector<512x256xbf16>, vector<128x256xf32> -> vector<128x256xf32>
    %c0_9 = arith.constant 0 : index
    %c0_10 = arith.constant 0 : index
    %11 = vector.load %arg5[%c0_9, %c0_10] : memref<1x256xf32, #tpu.memory_space<vmem>>, vector<1x256xf32>
    %12 = vector.broadcast %11 : vector<1x256xf32> to vector<128x256xf32>
    %13 = arith.addf %10, %12 : vector<128x256xf32>
    %cst_11 = arith.constant 0.000000e+00 : f32
    %14 = vector.broadcast %cst_11 : f32 to vector<128x256xf32>
    %15 = arith.maximumf %13, %14 : vector<128x256xf32>
    %16 = arith.truncf %15 : vector<128x256xf32> to vector<128x256xbf16>
    %c0_12 = arith.constant 0 : index
    %c0_13 = arith.constant 0 : index
    %17 = vector.load %arg6[%c0_12, %c0_13] : memref<256x128xbf16, #tpu.memory_space<vmem>>, vector<256x128xbf16>
    %cst_14 = arith.constant dense<0.000000e+00> : vector<128x128xf32>
    %18 = tpu.matmul %16, %17, %cst_14 {dimension_numbers = #tpu.dot_dimension_numbers<[1], [0], [0], [1], [0, 0, 1, 1], [], []>} : vector<128x256xbf16>, vector<256x128xbf16>, vector<128x128xf32> -> vector<128x128xf32>
    %c0_15 = arith.constant 0 : index
    %c0_16 = arith.constant 0 : index
    %19 = vector.load %arg7[%c0_15, %c0_16] : memref<1x128xf32, #tpu.memory_space<vmem>>, vector<1x128xf32>
    %20 = vector.broadcast %19 : vector<1x128xf32> to vector<128x128xf32>
    %21 = arith.addf %18, %20 : vector<128x128xf32>
    %cst_17 = arith.constant 0.000000e+00 : f32
    %22 = vector.broadcast %cst_17 : f32 to vector<128x128xf32>
    %23 = arith.maximumf %21, %22 : vector<128x128xf32>
    %24 = arith.truncf %23 : vector<128x128xf32> to vector<128x128xbf16>
    %c0_18 = arith.constant 0 : index
    %c0_19 = arith.constant 0 : index
    %25 = vector.load %arg8[%c0_18, %c0_19] : memref<128x128xbf16, #tpu.memory_space<vmem>>, vector<128x128xbf16>
    %cst_20 = arith.constant dense<0.000000e+00> : vector<128x128xf32>
    %26 = tpu.matmul %24, %25, %cst_20 {dimension_numbers = #tpu.dot_dimension_numbers<[1], [0], [0], [1], [0, 0, 1, 1], [], []>} : vector<128x128xbf16>, vector<128x128xbf16>, vector<128x128xf32> -> vector<128x128xf32>
    %c0_21 = arith.constant 0 : index
    %c0_22 = arith.constant 0 : index
    %27 = vector.load %arg9[%c0_21, %c0_22] : memref<1x128xf32, #tpu.memory_space<vmem>>, vector<1x128xf32>
    %28 = vector.broadcast %27 : vector<1x128xf32> to vector<128x128xf32>
    %29 = arith.addf %26, %28 : vector<128x128xf32>
    %30 = arith.negf %29 : vector<128x128xf32>
    %31 = math.exp %30 : vector<128x128xf32>
    %cst_23 = arith.constant 1.000000e+00 : f32
    %32 = vector.broadcast %cst_23 : f32 to vector<128x128xf32>
    %33 = arith.addf %32, %31 : vector<128x128xf32>
    %34 = arith.divf %32, %33 : vector<128x128xf32>
    %c0_24 = arith.constant 0 : index
    %c0_25 = arith.constant 0 : index
    %35 = vector.load %arg10[%c0_24, %c0_25] : memref<128x128xf32, #tpu.memory_space<vmem>>, vector<128x128xf32>
    tpu.vector_store %arg10[%c0_24, %c0_25], %34 {strides = array<i32>} : memref<128x128xf32, #tpu.memory_space<vmem>>, vector<128x128xf32>,
    return
  }
  func.func @transform_0(%arg0: i32) -> (i32, i32) {
    %c0_i32 = arith.constant 0 : i32
    %c0_i32_0 = arith.constant 0 : i32
    return %arg0, %c0_i32 : i32, i32
  }
  func.func @transform_1(%arg0: i32) -> (i32, i32) {
    %c0_i32 = arith.constant 0 : i32
    %c0_i32_0 = arith.constant 0 : i32
    %c0_i32_1 = arith.constant 0 : i32
    return %c0_i32, %c0_i32_0 : i32, i32
  }
  func.func @transform_2(%arg0: i32) -> (i32, i32) {
    %c0_i32 = arith.constant 0 : i32
    %c0_i32_0 = arith.constant 0 : i32
    %c0_i32_1 = arith.constant 0 : i32
    return %c0_i32, %c0_i32_0 : i32, i32
  }
  func.func @transform_3(%arg0: i32) -> (i32, i32) {
    %c0_i32 = arith.constant 0 : i32
    %c0_i32_0 = arith.constant 0 : i32
    %c0_i32_1 = arith.constant 0 : i32
    return %c0_i32, %c0_i32_0 : i32, i32
  }
  func.func @transform_4(%arg0: i32) -> (i32, i32) {
    %c0_i32 = arith.constant 0 : i32
    %c0_i32_0 = arith.constant 0 : i32
    %c0_i32_1 = arith.constant 0 : i32
    return %c0_i32, %c0_i32_0 : i32, i32
  }
  func.func @transform_5(%arg0: i32) -> (i32, i32) {
    %c0_i32 = arith.constant 0 : i32
    %c0_i32_0 = arith.constant 0 : i32
    %c0_i32_1 = arith.constant 0 : i32
    return %c0_i32, %c0_i32_0 : i32, i32
  }
  func.func @transform_6(%arg0: i32) -> (i32, i32) {
    %c0_i32 = arith.constant 0 : i32
    %c0_i32_0 = arith.constant 0 : i32
    %c0_i32_1 = arith.constant 0 : i32
    return %c0_i32, %c0_i32_0 : i32, i32
  }
  func.func @transform_7(%arg0: i32) -> (i32, i32) {
    %c0_i32 = arith.constant 0 : i32
    %c0_i32_0 = arith.constant 0 : i32
    %c0_i32_1 = arith.constant 0 : i32
    return %c0_i32, %c0_i32_0 : i32, i32
  }
  func.func @transform_8(%arg0: i32) -> (i32, i32) {
    %c0_i32 = arith.constant 0 : i32
    %c0_i32_0 = arith.constant 0 : i32
    %c0_i32_1 = arith.constant 0 : i32
    return %c0_i32, %c0_i32_0 : i32, i32
  }
  func.func @transform_9(%arg0: i32) -> (i32, i32) {
    %c0_i32 = arith.constant 0 : i32
    %c0_i32_0 = arith.constant 0 : i32
    return %arg0, %c0_i32 : i32, i32
  }
}

</mosaic_0001>

<llo_original>
// kernel: tpu_custom_call.1
$region0: #{tpu_custom_call.1}
  #allocation0 [shape = 'u32[]', space=smem, size = 0x4, offset = 0x4, fixed_abs, tag = 'smem constant byte address 0x4 - core index']
  #allocation1 [shape = 'u32[144,128]{1,0:T(1,128)}', space=vmem, size = 0x12000, scoped, tag = 'internal scratch']
  %s0 = inlined_call_operand.hbm [shape: bf16[256,256], index: 0, kind: input, shape index: {}]
  %s1 = inlined_call_operand.hbm [shape: bf16[256,512], index: 1, kind: input, shape index: {}]
  %s2 = inlined_call_operand.vmem [shape: f32[1,512], index: 2, kind: input, shape index: {}]
  %s3 = inlined_call_operand.hbm [shape: bf16[512,256], index: 3, kind: input, shape index: {}]
  %s4 = inlined_call_operand.vmem [shape: f32[1,256], index: 4, kind: input, shape index: {}]
  %s5 = inlined_call_operand.hbm [shape: bf16[256,128], index: 5, kind: input, shape index: {}]
  %s6 = inlined_call_operand.vmem [shape: f32[1,128], index: 6, kind: input, shape index: {}]
  %s7 = inlined_call_operand.hbm [shape: bf16[128,128], index: 7, kind: input, shape index: {}]
  %s8 = inlined_call_operand.vmem [shape: f32[1,128], index: 8, kind: input, shape index: {}]
  %s9 = inlined_call_operand.hbm [shape: f32[256,128], index: 9, kind: output, shape index: {}]
  %s10 = sld [smem:[#allocation0]]
  $region89: #{tpu_custom_call.1} parent=0
    _
  %s12 = ssub.s32 1, %s10
  %s13 = scalar_select 0, %s12, %s10
  $region1: #{tpu_custom_call.1} parent=0
    #allocation2 [shape = 'u8[131072]{0}', space=vmem, size = 0x20000, scoped, tag = 'input window, operand 0']
    #allocation3 [shape = 's32[2]{0}', space=sflag, size = 0x8, scoped, tag = 'scoped memory for tpu_custom_call.1']
    #allocation4 [shape = 's32[2]{0}', space=sflag, size = 0x8, scoped, tag = 'scoped memory for tpu_custom_call.1']
    #allocation5 [shape = 'u8[262144]{0}', space=vmem, size = 0x40000, scoped, tag = 'input window, operand 1, single buffered']
    #allocation6 [shape = 's32[1]{0}', space=sflag, size = 0x4, scoped, tag = 'scoped memory for tpu_custom_call.1']
    #allocation7 [shape = 'u8[262144]{0}', space=vmem, size = 0x40000, scoped, tag = 'input window, operand 3, single buffered']
    #allocation8 [shape = 'u8[65536]{0}', space=vmem, size = 0x10000, scoped, tag = 'input window, operand 5, single buffered']
    #allocation9 [shape = 's32[1]{0}', space=sflag, size = 0x4, scoped, tag = 'scoped memory for tpu_custom_call.1']
    #allocation10 [shape = 'u8[32768]{0}', space=vmem, size = 0x8000, scoped, tag = 'input window, operand 7, single buffered']
    #allocation11 [shape = 'u8[131072]{0}', space=vmem, size = 0x20000, scoped, tag = 'output window, operand 0']
    %14 = vsyncpa [#allocation3], 0
    %s15 = scalar_lea.sflag [#allocation3], 1
    %16 = vsyncpa %s15, 0
    %17 = vsyncpa [#allocation6], 0
    %18 = vsyncpa [#allocation9], 0
    %19 = vsyncpa [#allocation4], 0
    %s20 = scalar_lea.sflag [#allocation4], 1
    %21 = vsyncpa %s20, 0
    loop: start=0, step=1, limit=4
    $region2: #{tpu_custom_call.1} parent=1 // loop_pre_header
      _
    $region3: #{tpu_custom_call.1} parent=1 // loop_header
      %s23 = sphi 0, %s27
      %p24 = scmp.ge.s32.totalorder %s23, 4
      %s33 = sphi 0, %s35
      %s36 = sphi 0, %s33
      %s37 = sphi 0, %s36
      %s53 = sphi 0, %s37
      %s57 = sphi 0, %s57
      %s59 = sphi 0, %s57
      %s60 = sphi 0, %s59
      %s74 = sphi 0, %s60
      %s78 = sphi 0, %s78
      %s80 = sphi 0, %s78
      %s81 = sphi 0, %s80
      %s95 = sphi 0, %s81
      %s99 = sphi 0, %s99
      %s101 = sphi 0, %s99
      %s102 = sphi 0, %s101
      %s116 = sphi 0, %s102
      %s120 = sphi 0, %s120
      %s122 = sphi 0, %s120
      %s123 = sphi 0, %s122
      %s137 = sphi 0, %s123
      %s141 = sphi 0, %s141
      %s143 = sphi 0, %s141
      %s144 = sphi 0, %s143
      %s158 = sphi 0, %s144
      %s162 = sphi 0, %s162
      %s164 = sphi 0, %s162
      %s165 = sphi 0, %s164
      %s179 = sphi 0, %s165
      %s183 = sphi 0, %s183
      %s185 = sphi 0, %s183
      %s186 = sphi 0, %s185
      %s200 = sphi 0, %s186
      %s204 = sphi 0, %s204
      %s206 = sphi 0, %s204
      %s207 = sphi 0, %s206
      %s221 = sphi 0, %s207
      %s227 = sphi 0, %s229
      %s230 = sphi 0, %s227
      %s231 = sphi 0, %s230
      %s247 = sphi 0, %s231
    $region4: #{tpu_custom_call.1} parent=1 // loop_header_branch
      %26 = sbr.rel (%p24) target = $region8
    $region5: #{tpu_custom_call.1} parent=1 // loop_body
      %s28 = ssub.s32 %s23, 1
      %s29 = ssub.s32 %s23, 2
      %s30 = sadd.s32 %s23, 1
      %s31 = ssub.s32 %s23, %s30
      %p32 = scmp.eq.s32.totalorder %s31, 0
      %s34 = sadd.s32 %s33, 1
      %s35 = scalar_select %p32, %s33, %s34
      %p38 = pneg %p32
      %p39 = scmp.eq.s32.totalorder %s23, 1
      %p40 = por %p38, %p39
      %p41 = scmp.ne.s32.totalorder %s33, %s36
      %p42 = scmp.eq.s32.totalorder %s23, 0
      %p43 = por %p41, %p42
      %p44 = scmp.ne.s32.totalorder %s33, %s36
      %p45 = scmp.eq.s32.totalorder %s28, 1
      %p46 = por %p44, %p45
      %p47 = scmp.ne.s32.totalorder %s36, %s37
      %p48 = scmp.eq.s32.totalorder %s28, 0
      %p49 = por %p47, %p48
      %p50 = scmp.ne.s32.totalorder %s36, %s37
      %p51 = scmp.eq.s32.totalorder %s29, 1
      %p52 = por %p50, %p51
      %p54 = scmp.ne.s32.totalorder %s37, %s53
      %p55 = scmp.eq.s32.totalorder %s29, 0
      %p56 = por %p54, %p55
      %s58 = sadd.s32 %s57, 1
      %p61 = scmp.eq.s32.totalorder %s23, 1
      %p62 = scmp.ne.s32.totalorder %s57, %s59
      %p63 = scmp.eq.s32.totalorder %s23, 0
      %p64 = por %p62, %p63
      %p65 = scmp.ne.s32.totalorder %s57, %s59
      %p66 = scmp.eq.s32.totalorder %s28, 1
      %p67 = por %p65, %p66
      %p68 = scmp.ne.s32.totalorder %s59, %s60
      %p69 = scmp.eq.s32.totalorder %s28, 0
      %p70 = por %p68, %p69
      %p71 = scmp.ne.s32.totalorder %s59, %s60
      %p72 = scmp.eq.s32.totalorder %s29, 1
      %p73 = por %p71, %p72
      %p75 = scmp.ne.s32.totalorder %s60, %s74
      %p76 = scmp.eq.s32.totalorder %s29, 0
      %p77 = por %p75, %p76
      %s79 = sadd.s32 %s78, 1
      %p82 = scmp.eq.s32.totalorder %s23, 1
      %p83 = scmp.ne.s32.totalorder %s78, %s80
      %p84 = scmp.eq.s32.totalorder %s23, 0
      %p85 = por %p83, %p84
      %p86 = scmp.ne.s32.totalorder %s78, %s80
      %p87 = scmp.eq.s32.totalorder %s28, 1
      %p88 = por %p86, %p87
      %p89 = scmp.ne.s32.totalorder %s80, %s81
      %p90 = scmp.eq.s32.totalorder %s28, 0
      %p91 = por %p89, %p90
      %p92 = scmp.ne.s32.totalorder %s80, %s81
      %p93 = scmp.eq.s32.totalorder %s29, 1
      %p94 = por %p92, %p93
      %p96 = scmp.ne.s32.totalorder %s81, %s95
      %p97 = scmp.eq.s32.totalorder %s29, 0
      %p98 = por %p96, %p97
      %s100 = sadd.s32 %s99, 1
      %p103 = scmp.eq.s32.totalorder %s23, 1
      %p104 = scmp.ne.s32.totalorder %s99, %s101
      %p105 = scmp.eq.s32.totalorder %s23, 0
      %p106 = por %p104, %p105
      %p107 = scmp.ne.s32.totalorder %s99, %s101
      %p108 = scmp.eq.s32.totalorder %s28, 1
      %p109 = por %p107, %p108
      %p110 = scmp.ne.s32.totalorder %s101, %s102
      %p111 = scmp.eq.s32.totalorder %s28, 0
      %p112 = por %p110, %p111
      %p113 = scmp.ne.s32.totalorder %s101, %s102
      %p114 = scmp.eq.s32.totalorder %s29, 1
      %p115 = por %p113, %p114
      %p117 = scmp.ne.s32.totalorder %s102, %s116
      %p118 = scmp.eq.s32.totalorder %s29, 0
      %p119 = por %p117, %p118
      %s121 = sadd.s32 %s120, 1
      %p124 = scmp.eq.s32.totalorder %s23, 1
      %p125 = scmp.ne.s32.totalorder %s120, %s122
      %p126 = scmp.eq.s32.totalorder %s23, 0
      %p127 = por %p125, %p126
      %p128 = scmp.ne.s32.totalorder %s120, %s122
      %p129 = scmp.eq.s32.totalorder %s28, 1
      %p130 = por %p128, %p129
      %p131 = scmp.ne.s32.totalorder %s122, %s123
      %p132 = scmp.eq.s32.totalorder %s28, 0
      %p133 = por %p131, %p132
      %p134 = scmp.ne.s32.totalorder %s122, %s123
      %p135 = scmp.eq.s32.totalorder %s29, 1
      %p136 = por %p134, %p135
      %p138 = scmp.ne.s32.totalorder %s123, %s137
      %p139 = scmp.eq.s32.totalorder %s29, 0
      %p140 = por %p138, %p139
      %s142 = sadd.s32 %s141, 1
      %p145 = scmp.eq.s32.totalorder %s23, 1
      %p146 = scmp.ne.s32.totalorder %s141, %s143
      %p147 = scmp.eq.s32.totalorder %s23, 0
      %p148 = por %p146, %p147
      %p149 = scmp.ne.s32.totalorder %s141, %s143
      %p150 = scmp.eq.s32.totalorder %s28, 1
      %p151 = por %p149, %p150
      %p152 = scmp.ne.s32.totalorder %s143, %s144
      %p153 = scmp.eq.s32.totalorder %s28, 0
      %p154 = por %p152, %p153
      %p155 = scmp.ne.s32.totalorder %s143, %s144
      %p156 = scmp.eq.s32.totalorder %s29, 1
      %p157 = por %p155, %p156
      %p159 = scmp.ne.s32.totalorder %s144, %s158
      %p160 = scmp.eq.s32.totalorder %s29, 0
      %p161 = por %p159, %p160
      %s163 = sadd.s32 %s162, 1
      %p166 = scmp.eq.s32.totalorder %s23, 1
      %p167 = scmp.ne.s32.totalorder %s162, %s164
      %p168 = scmp.eq.s32.totalorder %s23, 0
      %p169 = por %p167, %p168
      %p170 = scmp.ne.s32.totalorder %s162, %s164
      %p171 = scmp.eq.s32.totalorder %s28, 1
      %p172 = por %p170, %p171
      %p173 = scmp.ne.s32.totalorder %s164, %s165
      %p174 = scmp.eq.s32.totalorder %s28, 0
      %p175 = por %p173, %p174
      %p176 = scmp.ne.s32.totalorder %s164, %s165
      %p177 = scmp.eq.s32.totalorder %s29, 1
      %p178 = por %p176, %p177
      %p180 = scmp.ne.s32.totalorder %s165, %s179
      %p181 = scmp.eq.s32.totalorder %s29, 0
      %p182 = por %p180, %p181
      %s184 = sadd.s32 %s183, 1
      %p187 = scmp.eq.s32.totalorder %s23, 1
      %p188 = scmp.ne.s32.totalorder %s183, %s185
      %p189 = scmp.eq.s32.totalorder %s23, 0
      %p190 = por %p188, %p189
      %p191 = scmp.ne.s32.totalorder %s183, %s185
      %p192 = scmp.eq.s32.totalorder %s28, 1
      %p193 = por %p191, %p192
      %p194 = scmp.ne.s32.totalorder %s185, %s186
      %p195 = scmp.eq.s32.totalorder %s28, 0
      %p196 = por %p194, %p195
      %p197 = scmp.ne.s32.totalorder %s185, %s186
      %p198 = scmp.eq.s32.totalorder %s29, 1
      %p199 = por %p197, %p198
      %p201 = scmp.ne.s32.totalorder %s186, %s200
      %p202 = scmp.eq.s32.totalorder %s29, 0
      %p203 = por %p201, %p202
      %s205 = sadd.s32 %s204, 1
      %p208 = scmp.eq.s32.totalorder %s23, 1
      %p209 = scmp.ne.s32.totalorder %s204, %s206
      %p210 = scmp.eq.s32.totalorder %s23, 0
      %p211 = por %p209, %p210
      %p212 = scmp.ne.s32.totalorder %s204, %s206
      %p213 = scmp.eq.s32.totalorder %s28, 1
      %p214 = por %p212, %p213
      %p215 = scmp.ne.s32.totalorder %s206, %s207
      %p216 = scmp.eq.s32.totalorder %s28, 0
      %p217 = por %p215, %p216
      %p218 = scmp.ne.s32.totalorder %s206, %s207
      %p219 = scmp.eq.s32.totalorder %s29, 1
      %p220 = por %p218, %p219
      %p222 = scmp.ne.s32.totalorder %s207, %s221
      %p223 = scmp.eq.s32.totalorder %s29, 0
      %p224 = por %p222, %p223
      %s225 = ssub.s32 %s23, %s30
      %p226 = scmp.eq.s32.totalorder %s225, 0
      %s228 = sadd.s32 %s227, 1
      %s229 = scalar_select %p226, %s227, %s228
      %p232 = pneg %p226
      %p233 = scmp.eq.s32.totalorder %s23, 1
      %p234 = por %p232, %p233
      %p235 = scmp.ne.s32.totalorder %s227, %s230
      %p236 = scmp.eq.s32.totalorder %s23, 0
      %p237 = por %p235, %p236
      %p238 = scmp.ne.s32.totalorder %s227, %s230
      %p239 = scmp.eq.s32.totalorder %s28, 1
      %p240 = por %p238, %p239
      %p241 = scmp.ne.s32.totalorder %s230, %s231
      %p242 = scmp.eq.s32.totalorder %s28, 0
      %p243 = por %p241, %p242
      %p244 = scmp.ne.s32.totalorder %s230, %s231
      %p245 = scmp.eq.s32.totalorder %s29, 1
      %p246 = por %p244, %p245
      %p248 = scmp.ne.s32.totalorder %s231, %s247
      %p249 = scmp.eq.s32.totalorder %s29, 0
      %p250 = por %p248, %p249
      %p251 = scmp.le.s32.totalorder 1, %s23
      %p252 = scmp.lt.s32.totalorder %s23, 3
      %p253 = pnand %p251, %p252
      %p254 = pneg %p253
      // Predicated region
      $region9: #{tpu_custom_call.1} parent=5 // pred_check
        _
      $region10: #{tpu_custom_call.1} parent=5 // pred_check_branch
        %256 = sbr.rel (%p253) target = $region12
      $region11: #{tpu_custom_call.1} parent=5 // pred_region
        %s257 = ssub.s32 %s23, 1
        // Predicated region
        $region13: #{tpu_custom_call.1} parent=11 // pred_check
          %p258 = pneg %p70
        $region14: #{tpu_custom_call.1} parent=11 // pred_check_branch
          %260 = sbr.rel (%p258) target = $region16
        $region15: #{tpu_custom_call.1} parent=11 // pred_region
          %s262 = ssub.s32 8192, 8192
          %263 = vsyncadd [#allocation6], %s262
          %s264 = sshll.u32 [#allocation5], 4
          %s265 = int_to_ptr.vmem [resolvable:$true] %s264
          %270 = dma.hbm_to_vmem [thread:$0]  %s1, 8192, %s265, [#allocation6], 256, 256, 16
        $region16: #{tpu_custom_call.1} parent=11 // pred_fallthru
          _
        // Predicated region
        $region17: #{tpu_custom_call.1} parent=11 // pred_check
          %p271 = pneg %p91
        $region18: #{tpu_custom_call.1} parent=11 // pred_check_branch
          %273 = sbr.rel (%p271) target = $region20
        $region19: #{tpu_custom_call.1} parent=11 // pred_region
          _
        $region20: #{tpu_custom_call.1} parent=11 // pred_fallthru
          _
        // Predicated region
        $region21: #{tpu_custom_call.1} parent=11 // pred_check
          %p274 = pneg %p112
        $region22: #{tpu_custom_call.1} parent=11 // pred_check_branch
          %276 = sbr.rel (%p274) target = $region24
        $region23: #{tpu_custom_call.1} parent=11 // pred_region
          %s278 = ssub.s32 8192, 8192
          %279 = vsyncadd [#allocation6], %s278
          %s280 = sshll.u32 [#allocation7], 4
          %s281 = int_to_ptr.vmem [resolvable:$true] %s280
          %286 = dma.hbm_to_vmem [thread:$0]  %s3, 8192, %s281, [#allocation6], 128, 128, 8
        $region24: #{tpu_custom_call.1} parent=11 // pred_fallthru
          _
        // Predicated region
        $region25: #{tpu_custom_call.1} parent=11 // pred_check
          %p287 = pneg %p133
        $region26: #{tpu_custom_call.1} parent=11 // pred_check_branch
          %289 = sbr.rel (%p287) target = $region28
        $region27: #{tpu_custom_call.1} parent=11 // pred_region
          _
        $region28: #{tpu_custom_call.1} parent=11 // pred_fallthru
          _
        // Predicated region
        $region29: #{tpu_custom_call.1} parent=11 // pred_check
          %p290 = pneg %p154
        $region30: #{tpu_custom_call.1} parent=11 // pred_check_branch
          %292 = sbr.rel (%p290) target = $region32
        $region31: #{tpu_custom_call.1} parent=11 // pred_region
          %s294 = ssub.s32 2048, 2048
          %295 = vsyncadd [#allocation9], %s294
          %s296 = sshll.u32 [#allocation8], 4
          %s297 = int_to_ptr.vmem [resolvable:$true] %s296
          %302 = dma.hbm_to_vmem [thread:$0]  %s5, 2048, %s297, [#allocation9], 64, 64, 4
        $region32: #{tpu_custom_call.1} parent=11 // pred_fallthru
          _
        // Predicated region
        $region33: #{tpu_custom_call.1} parent=11 // pred_check
          %p303 = pneg %p175
        $region34: #{tpu_custom_call.1} parent=11 // pred_check_branch
          %305 = sbr.rel (%p303) target = $region36
        $region35: #{tpu_custom_call.1} parent=11 // pred_region
          _
        $region36: #{tpu_custom_call.1} parent=11 // pred_fallthru
          _
        // Predicated region
        $region37: #{tpu_custom_call.1} parent=11 // pred_check
          %p306 = pneg %p196
        $region38: #{tpu_custom_call.1} parent=11 // pred_check_branch
          %308 = sbr.rel (%p306) target = $region40
        $region39: #{tpu_custom_call.1} parent=11 // pred_region
          %s310 = ssub.s32 1024, 1024
          %311 = vsyncadd [#allocation9], %s310
          %s312 = sshll.u32 [#allocation10], 4
          %s313 = int_to_ptr.vmem [resolvable:$true] %s312
          %318 = dma.hbm_to_vmem [thread:$0]  %s7, 1024, %s313, [#allocation9], 64, 64, 4
        $region40: #{tpu_custom_call.1} parent=11 // pred_fallthru
          _
        // Predicated region
        $region41: #{tpu_custom_call.1} parent=11 // pred_check
          %p319 = pneg %p217
        $region42: #{tpu_custom_call.1} parent=11 // pred_check_branch
          %321 = sbr.rel (%p319) target = $region44
        $region43: #{tpu_custom_call.1} parent=11 // pred_region
          _
        $region44: #{tpu_custom_call.1} parent=11 // pred_fallthru
          _
      $region12: #{tpu_custom_call.1} parent=5 // pred_fallthru
        _
      %p322 = scmp.lt.s32.totalorder %s23, 2
      // Predicated region
      $region45: #{tpu_custom_call.1} parent=5 // pred_check
        %p323 = pneg %p322
      $region46: #{tpu_custom_call.1} parent=5 // pred_check_branch
        %325 = sbr.rel (%p323) target = $region48
      $region47: #{tpu_custom_call.1} parent=5 // pred_region
        // Predicated region
        $region49: #{tpu_custom_call.1} parent=47 // pred_check
          %p326 = pneg %p43
        $region50: #{tpu_custom_call.1} parent=47 // pred_check_branch
          %328 = sbr.rel (%p326) target = $region52
        $region51: #{tpu_custom_call.1} parent=47 // pred_region
          %s329 = sand.u32 %s33, 1
          %s330 = scalar_lea.sflag [#allocation3], %s329
          %s331 = sand.u32 %s33, 1
          %s332 = smul.addr %s331, 128
          %s333 = scalar_lea.vmem [#allocation2], %s332
          %s334 = smul.u32 16, %s23
          %s336 = ssub.s32 2048, 2048
          %337 = vsyncadd %s330, %s336
          %s338 = smul.addr %s334, 2
          %s339 = smul.addr %s338, 64
          %s340 = scalar_lea.hbm %s0, %s339
          %s341 = sshll.u32 %s333, 4
          %s342 = int_to_ptr.vmem [resolvable:$true] %s341
          %347 = dma.hbm_to_vmem [thread:$0]  %s340, 2048, %s342, %s330, 128, 128, 8
        $region52: #{tpu_custom_call.1} parent=47 // pred_fallthru
          _
      $region48: #{tpu_custom_call.1} parent=5 // pred_fallthru
        _
      %p348 = scmp.le.s32.totalorder 1, %s23
      %p349 = scmp.lt.s32.totalorder %s23, 3
      %p350 = pnand %p348, %p349
      %p351 = pneg %p350
      // Predicated region
      $region53: #{tpu_custom_call.1} parent=5 // pred_check
        _
      $region54: #{tpu_custom_call.1} parent=5 // pred_check_branch
        %353 = sbr.rel (%p350) target = $region56
      $region55: #{tpu_custom_call.1} parent=5 // pred_region
        %s354 = ssub.s32 %s23, 1
        %s355 = sand.u32 %s36, 1
        %s356 = scalar_lea.sflag [#allocation3], %s355
        %s357 = sand.u32 %s36, 1
        %s358 = smul.addr %s357, 128
        %s359 = scalar_lea.vmem [#allocation2], %s358
        // Predicated region
        $region57: #{tpu_custom_call.1} parent=55 // pred_check
          %p360 = pneg %p49
        $region58: #{tpu_custom_call.1} parent=55 // pred_check_branch
          %362 = sbr.rel (%p360) target = $region60
        $region59: #{tpu_custom_call.1} parent=55 // pred_region
          %363 = dma.done %s356, 2048
        $region60: #{tpu_custom_call.1} parent=55 // pred_fallthru
          _
        // Predicated region
        $region61: #{tpu_custom_call.1} parent=55 // pred_check
          %p364 = pneg %p70
        $region62: #{tpu_custom_call.1} parent=55 // pred_check_branch
          %366 = sbr.rel (%p364) target = $region64
        $region63: #{tpu_custom_call.1} parent=55 // pred_region
          %367 = dma.done [#allocation6], 8192
        $region64: #{tpu_custom_call.1} parent=55 // pred_fallthru
          _
        // Predicated region
        $region65: #{tpu_custom_call.1} parent=55 // pred_check
          %p368 = pneg %p112
        $region66: #{tpu_custom_call.1} parent=55 // pred_check_branch
          %370 = sbr.rel (%p368) target = $region68
        $region67: #{tpu_custom_call.1} parent=55 // pred_region
          %371 = dma.done [#allocation6], 8192
        $region68: #{tpu_custom_call.1} parent=55 // pred_fallthru
          _
        // Predicated region
        $region69: #{tpu_custom_call.1} parent=55 // pred_check
          %p372 = pneg %p154
        $region70: #{tpu_custom_call.1} parent=55 // pred_check_branch
          %374 = sbr.rel (%p372) target = $region72
        $region71: #{tpu_custom_call.1} parent=55 // pred_region
          %375 = dma.done [#allocation9], 2048
        $region72: #{tpu_custom_call.1} parent=55 // pred_fallthru
          _
        // Predicated region
        $region73: #{tpu_custom_call.1} parent=55 // pred_check
          %p376 = pneg %p196
        $region74: #{tpu_custom_call.1} parent=55 // pred_check_branch
          %378 = sbr.rel (%p376) target = $region76
        $region75: #{tpu_custom_call.1} parent=55 // pred_region
          %379 = dma.done [#allocation9], 1024
        $region76: #{tpu_custom_call.1} parent=55 // pred_fallthru
          _
        %s380 = sand.u32 %s36, 1
        %s381 = scalar_lea.sflag [#allocation3], %s380
        %s382 = sand.u32 %s36, 1
        %s383 = smul.addr %s382, 128
        %s384 = scalar_lea.vmem [#allocation2], %s383
        %p385 = pneg %p49
        %p386 = pneg %p46
        %p387 = pneg %p70
        %p388 = pneg %p67
        %p389 = pneg %p91
        %p390 = pneg %p88
        %p391 = pneg %p112
        %p392 = pneg %p109
        %p393 = pneg %p133
        %p394 = pneg %p130
        %p395 = pneg %p154
        %p396 = pneg %p151
        %p397 = pneg %p175
        %p398 = pneg %p172
        %p399 = pneg %p196
        %p400 = pneg %p193
        %p401 = pneg %p217
        %p402 = pneg %p214
        %p403 = pneg %p243
        %p404 = pneg %p240
        %s405 = sand.u32 %s230, 1
        %s406 = scalar_lea.sflag [#allocation4], %s405
        %s407 = sand.u32 %s230, 1
        %s408 = smul.addr %s407, 128
        %s409 = scalar_lea.vmem [#allocation11], %s408
        %s410 = smul.u32 16, %s28
        %s411 = smul.u32 16, %s28
        %v413 = vld [vmem:[%s359] sm:$0xff]
        %v414 = vld [vmem:[%s359 + $0x8] sm:$0xff]
        %v415 = vld [vmem:[%s359 + $0x10] sm:$0xff]
        %v416 = vld [vmem:[%s359 + $0x18] sm:$0xff]
        %v417 = vld [vmem:[%s359 + $0x20] sm:$0xff]
        %v418 = vld [vmem:[%s359 + $0x28] sm:$0xff]
        %v419 = vld [vmem:[%s359 + $0x30] sm:$0xff]
        %v420 = vld [vmem:[%s359 + $0x38] sm:$0xff]
        %v421 = vld [vmem:[%s359 + $0x40] sm:$0xff]
        %v422 = vld [vmem:[%s359 + $0x48] sm:$0xff]
        %v423 = vld [vmem:[%s359 + $0x50] sm:$0xff]
        %v424 = vld [vmem:[%s359 + $0x58] sm:$0xff]
        %v425 = vld [vmem:[%s359 + $0x60] sm:$0xff]
        %v426 = vld [vmem:[%s359 + $0x68] sm:$0xff]
        %v427 = vld [vmem:[%s359 + $0x70] sm:$0xff]
        %v428 = vld [vmem:[%s359 + $0x78] sm:$0xff]
        %v429 = vld [vmem:[#allocation5] sm:$0xff]
        %v430 = vld [vmem:[#allocation5 + $0x8] sm:$0xff]
        %v431 = vld [vmem:[#allocation5 + $0x10] sm:$0xff]
        %v432 = vld [vmem:[#allocation5 + $0x18] sm:$0xff]
        %v433 = vld [vmem:[#allocation5 + $0x20] sm:$0xff]
        %v434 = vld [vmem:[#allocation5 + $0x28] sm:$0xff]
        %v435 = vld [vmem:[#allocation5 + $0x30] sm:$0xff]
        %v436 = vld [vmem:[#allocation5 + $0x38] sm:$0xff]
        %v437 = vld [vmem:[#allocation5 + $0x40] sm:$0xff]
        %v438 = vld [vmem:[#allocation5 + $0x48] sm:$0xff]
        %v439 = vld [vmem:[#allocation5 + $0x50] sm:$0xff]
        %v440 = vld [vmem:[#allocation5 + $0x58] sm:$0xff]
        %v441 = vld [vmem:[#allocation5 + $0x60] sm:$0xff]
        %v442 = vld [vmem:[#allocation5 + $0x68] sm:$0xff]
        %v443 = vld [vmem:[#allocation5 + $0x70] sm:$0xff]
        %v444 = vld [vmem:[#allocation5 + $0x78] sm:$0xff]
        %v445 = vld [vmem:[#allocation5 + $0x80] sm:$0xff]
        %v446 = vld [vmem:[#allocation5 + $0x88] sm:$0xff]
        %v447 = vld [vmem:[#allocation5 + $0x90] sm:$0xff]
        %v448 = vld [vmem:[#allocation5 + $0x98] sm:$0xff]
        %v449 = vld [vmem:[#allocation5 + $0xa0] sm:$0xff]
        %v450 = vld [vmem:[#allocation5 + $0xa8] sm:$0xff]
        %v451 = vld [vmem:[#allocation5 + $0xb0] sm:$0xff]
        %v452 = vld [vmem:[#allocation5 + $0xb8] sm:$0xff]
        %v453 = vld [vmem:[#allocation5 + $0xc0] sm:$0xff]
        %v454 = vld [vmem:[#allocation5 + $0xc8] sm:$0xff]
        %v455 = vld [vmem:[#allocation5 + $0xd0] sm:$0xff]
        %v456 = vld [vmem:[#allocation5 + $0xd8] sm:$0xff]
        %v457 = vld [vmem:[#allocation5 + $0xe0] sm:$0xff]
        %v458 = vld [vmem:[#allocation5 + $0xe8] sm:$0xff]
        %v459 = vld [vmem:[#allocation5 + $0xf0] sm:$0xff]
        %v460 = vld [vmem:[#allocation5 + $0xf8] sm:$0xff]
        %v461 = vld [vmem:[#allocation5 + $0x100] sm:$0xff]
        %v462 = vld [vmem:[#allocation5 + $0x108] sm:$0xff]
        %v463 = vld [vmem:[#allocation5 + $0x110] sm:$0xff]
        %v464 = vld [vmem:[#allocation5 + $0x118] sm:$0xff]
        %v465 = vld [vmem:[#allocation5 + $0x120] sm:$0xff]
        %v466 = vld [vmem:[#allocation5 + $0x128] sm:$0xff]
        %v467 = vld [vmem:[#allocation5 + $0x130] sm:$0xff]
        %v468 = vld [vmem:[#allocation5 + $0x138] sm:$0xff]
        %v469 = vld [vmem:[#allocation5 + $0x140] sm:$0xff]
        %v470 = vld [vmem:[#allocation5 + $0x148] sm:$0xff]
        %v471 = vld [vmem:[#allocation5 + $0x150] sm:$0xff]
        %v472 = vld [vmem:[#allocation5 + $0x158] sm:$0xff]
        %v473 = vld [vmem:[#allocation5 + $0x160] sm:$0xff]
        %v474 = vld [vmem:[#allocation5 + $0x168] sm:$0xff]
        %v475 = vld [vmem:[#allocation5 + $0x170] sm:$0xff]
        %v476 = vld [vmem:[#allocation5 + $0x178] sm:$0xff]
        %v477 = vld [vmem:[#allocation5 + $0x180] sm:$0xff]
        %v478 = vld [vmem:[#allocation5 + $0x188] sm:$0xff]
        %v479 = vld [vmem:[#allocation5 + $0x190] sm:$0xff]
        %v480 = vld [vmem:[#allocation5 + $0x198] sm:$0xff]
        %v481 = vld [vmem:[#allocation5 + $0x1a0] sm:$0xff]
        %v482 = vld [vmem:[#allocation5 + $0x1a8] sm:$0xff]
        %v483 = vld [vmem:[#allocation5 + $0x1b0] sm:$0xff]
        %v484 = vld [vmem:[#allocation5 + $0x1b8] sm:$0xff]
        %v485 = vld [vmem:[#allocation5 + $0x1c0] sm:$0xff]
        %v486 = vld [vmem:[#allocation5 + $0x1c8] sm:$0xff]
        %v487 = vld [vmem:[#allocation5 + $0x1d0] sm:$0xff]
        %v488 = vld [vmem:[#allocation5 + $0x1d8] sm:$0xff]
        %v489 = vld [vmem:[#allocation5 + $0x1e0] sm:$0xff]
        %v490 = vld [vmem:[#allocation5 + $0x1e8] sm:$0xff]
        %v491 = vld [vmem:[#allocation5 + $0x1f0] sm:$0xff]
        %v492 = vld [vmem:[#allocation5 + $0x1f8] sm:$0xff]
        %v493 = vld [vmem:[%s2] sm:$0xf]
        %v495 = vlaneseq
        %v496 = vshrl.u32 %v495, 7
        %v497 = vsub.s32 0, %v496
        %v498 = vrot.slane %v493, %v497
        %v499 = vlaneseq
        %v500 = vshrl.u32 %v499, 7
        %v501 = vsub.s32 1, %v500
        %v502 = vrot.slane %v493, %v501
        %v503 = vlaneseq
        %v504 = vshrl.u32 %v503, 7
        %v505 = vsub.s32 2, %v504
        %v506 = vrot.slane %v493, %v505
        %v507 = vlaneseq
        %v508 = vshrl.u32 %v507, 7
        %v509 = vsub.s32 3, %v508
        %v510 = vrot.slane %v493, %v509
        %v531 = vunpack.c.l.b16 %v413
        %v532 = vunpack.c.h.b16 %v413
        %v533 = vunpack.c.l.b16 %v414
        %v534 = vunpack.c.h.b16 %v414
        %v535 = vunpack.c.l.b16 %v415
        %v536 = vunpack.c.h.b16 %v415
        %v537 = vunpack.c.l.b16 %v416
        %v538 = vunpack.c.h.b16 %v416
        %v539 = vunpack.c.l.b16 %v417
        %v540 = vunpack.c.h.b16 %v417
        %v541 = vunpack.c.l.b16 %v418
        %v542 = vunpack.c.h.b16 %v418
        %v543 = vunpack.c.l.b16 %v419
        %v544 = vunpack.c.h.b16 %v419
        %v545 = vunpack.c.l.b16 %v420
        %v546 = vunpack.c.h.b16 %v420
        %v547 = vunpack.c.l.b16 %v421
        %v548 = vunpack.c.h.b16 %v421
        %v549 = vunpack.c.l.b16 %v422
        %v550 = vunpack.c.h.b16 %v422
        %v551 = vunpack.c.l.b16 %v423
        %v552 = vunpack.c.h.b16 %v423
        %v553 = vunpack.c.l.b16 %v424
        %v554 = vunpack.c.h.b16 %v424
        %v555 = vunpack.c.l.b16 %v425
        %v556 = vunpack.c.h.b16 %v425
        %v557 = vunpack.c.l.b16 %v426
        %v558 = vunpack.c.h.b16 %v426
        %v559 = vunpack.c.l.b16 %v427
        %v560 = vunpack.c.h.b16 %v427
        %v561 = vunpack.c.l.b16 %v428
        %v562 = vunpack.c.h.b16 %v428
        %v563 = vpack.c.b16 %v533, %v531
        %v564 = vpack.c.b16 %v534, %v532
        %v565 = vpack.c.b16 %v537, %v535
        %v566 = vpack.c.b16 %v538, %v536
        %v567 = vpack.c.b16 %v541, %v539
        %v568 = vpack.c.b16 %v542, %v540
        %v569 = vpack.c.b16 %v545, %v543
        %v570 = vpack.c.b16 %v546, %v544
        %v571 = vpack.c.b16 %v549, %v547
        %v572 = vpack.c.b16 %v550, %v548
        %v573 = vpack.c.b16 %v553, %v551
        %v574 = vpack.c.b16 %v554, %v552
        %v575 = vpack.c.b16 %v557, %v555
        %v576 = vpack.c.b16 %v558, %v556
        %v577 = vpack.c.b16 %v561, %v559
        %v578 = vpack.c.b16 %v562, %v560
        %v659 = vunpack.c.l.b16 %v429
        %v660 = vunpack.c.h.b16 %v429
        %v661 = vunpack.c.l.b16 %v430
        %v662 = vunpack.c.h.b16 %v430
        %v663 = vunpack.c.l.b16 %v431
        %v664 = vunpack.c.h.b16 %v431
        %v665 = vunpack.c.l.b16 %v432
        %v666 = vunpack.c.h.b16 %v432
        %v667 = vunpack.c.l.b16 %v433
        %v668 = vunpack.c.h.b16 %v433
        %v669 = vunpack.c.l.b16 %v434
        %v670 = vunpack.c.h.b16 %v434
        %v671 = vunpack.c.l.b16 %v435
        %v672 = vunpack.c.h.b16 %v435
        %v673 = vunpack.c.l.b16 %v436
        %v674 = vunpack.c.h.b16 %v436
        %v675 = vunpack.c.l.b16 %v437
        %v676 = vunpack.c.h.b16 %v437
        %v677 = vunpack.c.l.b16 %v438
        %v678 = vunpack.c.h.b16 %v438
        %v679 = vunpack.c.l.b16 %v439
        %v680 = vunpack.c.h.b16 %v439
        %v681 = vunpack.c.l.b16 %v440
        %v682 = vunpack.c.h.b16 %v440
        %v683 = vunpack.c.l.b16 %v441
        %v684 = vunpack.c.h.b16 %v441
        %v685 = vunpack.c.l.b16 %v442
        %v686 = vunpack.c.h.b16 %v442
        %v687 = vunpack.c.l.b16 %v443
        %v688 = vunpack.c.h.b16 %v443
        %v689 = vunpack.c.l.b16 %v444
        %v690 = vunpack.c.h.b16 %v444
        %v691 = vunpack.c.l.b16 %v445
        %v692 = vunpack.c.h.b16 %v445
        %v693 = vunpack.c.l.b16 %v446
        %v694 = vunpack.c.h.b16 %v446
        %v695 = vunpack.c.l.b16 %v447
        %v696 = vunpack.c.h.b16 %v447
        %v697 = vunpack.c.l.b16 %v448
        %v698 = vunpack.c.h.b16 %v448
        %v699 = vunpack.c.l.b16 %v449
        %v700 = vunpack.c.h.b16 %v449
        %v701 = vunpack.c.l.b16 %v450
        %v702 = vunpack.c.h.b16 %v450
        %v703 = vunpack.c.l.b16 %v451
        %v704 = vunpack.c.h.b16 %v451
        %v705 = vunpack.c.l.b16 %v452
        %v706 = vunpack.c.h.b16 %v452
        %v707 = vunpack.c.l.b16 %v453
        %v708 = vunpack.c.h.b16 %v453
        %v709 = vunpack.c.l.b16 %v454
        %v710 = vunpack.c.h.b16 %v454
        %v711 = vunpack.c.l.b16 %v455
        %v712 = vunpack.c.h.b16 %v455
        %v713 = vunpack.c.l.b16 %v456
        %v714 = vunpack.c.h.b16 %v456
        %v715 = vunpack.c.l.b16 %v457
        %v716 = vunpack.c.h.b16 %v457
        %v717 = vunpack.c.l.b16 %v458
        %v718 = vunpack.c.h.b16 %v458
        %v719 = vunpack.c.l.b16 %v459
        %v720 = vunpack.c.h.b16 %v459
        %v721 = vunpack.c.l.b16 %v460
        %v722 = vunpack.c.h.b16 %v460
        %v723 = vunpack.c.l.b16 %v461
        %v724 = vunpack.c.h.b16 %v461
        %v725 = vunpack.c.l.b16 %v462
        %v726 = vunpack.c.h.b16 %v462
        %v727 = vunpack.c.l.b16 %v463
        %v728 = vunpack.c.h.b16 %v463
        %v729 = vunpack.c.l.b16 %v464
        %v730 = vunpack.c.h.b16 %v464
        %v731 = vunpack.c.l.b16 %v465
        %v732 = vunpack.c.h.b16 %v465
        %v733 = vunpack.c.l.b16 %v466
        %v734 = vunpack.c.h.b16 %v466
        %v735 = vunpack.c.l.b16 %v467
        %v736 = vunpack.c.h.b16 %v467
        %v737 = vunpack.c.l.b16 %v468
        %v738 = vunpack.c.h.b16 %v468
        %v739 = vunpack.c.l.b16 %v469
        %v740 = vunpack.c.h.b16 %v469
        %v741 = vunpack.c.l.b16 %v470
        %v742 = vunpack.c.h.b16 %v470
        %v743 = vunpack.c.l.b16 %v471
        %v744 = vunpack.c.h.b16 %v471
        %v745 = vunpack.c.l.b16 %v472
        %v746 = vunpack.c.h.b16 %v472
        %v747 = vunpack.c.l.b16 %v473
        %v748 = vunpack.c.h.b16 %v473
        %v749 = vunpack.c.l.b16 %v474
        %v750 = vunpack.c.h.b16 %v474
        %v751 = vunpack.c.l.b16 %v475
        %v752 = vunpack.c.h.b16 %v475
        %v753 = vunpack.c.l.b16 %v476
        %v754 = vunpack.c.h.b16 %v476
        %v755 = vunpack.c.l.b16 %v477
        %v756 = vunpack.c.h.b16 %v477
        %v757 = vunpack.c.l.b16 %v478
        %v758 = vunpack.c.h.b16 %v478
        %v759 = vunpack.c.l.b16 %v479
        %v760 = vunpack.c.h.b16 %v479
        %v761 = vunpack.c.l.b16 %v480
        %v762 = vunpack.c.h.b16 %v480
        %v763 = vunpack.c.l.b16 %v481
        %v764 = vunpack.c.h.b16 %v481
        %v765 = vunpack.c.l.b16 %v482
        %v766 = vunpack.c.h.b16 %v482
        %v767 = vunpack.c.l.b16 %v483
        %v768 = vunpack.c.h.b16 %v483
        %v769 = vunpack.c.l.b16 %v484
        %v770 = vunpack.c.h.b16 %v484
        %v771 = vunpack.c.l.b16 %v485
        %v772 = vunpack.c.h.b16 %v485
        %v773 = vunpack.c.l.b16 %v486
        %v774 = vunpack.c.h.b16 %v486
        %v775 = vunpack.c.l.b16 %v487
        %v776 = vunpack.c.h.b16 %v487
        %v777 = vunpack.c.l.b16 %v488
        %v778 = vunpack.c.h.b16 %v488
        %v779 = vunpack.c.l.b16 %v489
        %v780 = vunpack.c.h.b16 %v489
        %v781 = vunpack.c.l.b16 %v490
        %v782 = vunpack.c.h.b16 %v490
        %v783 = vunpack.c.l.b16 %v491
        %v784 = vunpack.c.h.b16 %v491
        %v785 = vunpack.c.l.b16 %v492
        %v786 = vunpack.c.h.b16 %v492
        %v787 = vpack.c.b16 %v663, %v659
        %v788 = vpack.c.b16 %v664, %v660
        %v789 = vpack.c.b16 %v665, %v661
        %v790 = vpack.c.b16 %v666, %v662
        %v791 = vpack.c.b16 %v671, %v667
        %v792 = vpack.c.b16 %v672, %v668
        %v793 = vpack.c.b16 %v673, %v669
        %v794 = vpack.c.b16 %v674, %v670
        %v795 = vpack.c.b16 %v679, %v675
        %v796 = vpack.c.b16 %v680, %v676
        %v797 = vpack.c.b16 %v681, %v677
        %v798 = vpack.c.b16 %v682, %v678
        %v799 = vpack.c.b16 %v687, %v683
        %v800 = vpack.c.b16 %v688, %v684
        %v801 = vpack.c.b16 %v689, %v685
        %v802 = vpack.c.b16 %v690, %v686
        %v803 = vpack.c.b16 %v695, %v691
        %v804 = vpack.c.b16 %v696, %v692
        %v805 = vpack.c.b16 %v697, %v693
        %v806 = vpack.c.b16 %v698, %v694
        %v807 = vpack.c.b16 %v703, %v699
        %v808 = vpack.c.b16 %v704, %v700
        %v809 = vpack.c.b16 %v705, %v701
        %v810 = vpack.c.b16 %v706, %v702
        %v811 = vpack.c.b16 %v711, %v707
        %v812 = vpack.c.b16 %v712, %v708
        %v813 = vpack.c.b16 %v713, %v709
        %v814 = vpack.c.b16 %v714, %v710
        %v815 = vpack.c.b16 %v719, %v715
        %v816 = vpack.c.b16 %v720, %v716
        %v817 = vpack.c.b16 %v721, %v717
        %v818 = vpack.c.b16 %v722, %v718
        %v819 = vpack.c.b16 %v727, %v723
        %v820 = vpack.c.b16 %v728, %v724
        %v821 = vpack.c.b16 %v729, %v725
        %v822 = vpack.c.b16 %v730, %v726
        %v823 = vpack.c.b16 %v735, %v731
        %v824 = vpack.c.b16 %v736, %v732
        %v825 = vpack.c.b16 %v737, %v733
        %v826 = vpack.c.b16 %v738, %v734
        %v827 = vpack.c.b16 %v743, %v739
        %v828 = vpack.c.b16 %v744, %v740
        %v829 = vpack.c.b16 %v745, %v741
        %v830 = vpack.c.b16 %v746, %v742
        %v831 = vpack.c.b16 %v751, %v747
        %v832 = vpack.c.b16 %v752, %v748
        %v833 = vpack.c.b16 %v753, %v749
        %v834 = vpack.c.b16 %v754, %v750
        %v835 = vpack.c.b16 %v759, %v755
        %v836 = vpack.c.b16 %v760, %v756
        %v837 = vpack.c.b16 %v761, %v757
        %v838 = vpack.c.b16 %v762, %v758
        %v839 = vpack.c.b16 %v767, %v763
        %v840 = vpack.c.b16 %v768, %v764
        %v841 = vpack.c.b16 %v769, %v765
        %v842 = vpack.c.b16 %v770, %v766
        %v843 = vpack.c.b16 %v775, %v771
        %v844 = vpack.c.b16 %v776, %v772
        %v845 = vpack.c.b16 %v777, %v773
        %v846 = vpack.c.b16 %v778, %v774
        %v847 = vpack.c.b16 %v783, %v779
        %v848 = vpack.c.b16 %v784, %v780
        %v849 = vpack.c.b16 %v785, %v781
        %v850 = vpack.c.b16 %v786, %v782
        %915 = vmatprep.subr.bf16.mxu0 %v788
        %916 = vmatpush1.bf16.msra.mxu0 %v787
        %917 = vmatprep.subr.bf16.mxu0 %v792
        %918 = vmatpush1.bf16.msra.mxu0 %v791
        %919 = vmatprep.subr.bf16.mxu0 %v796
        %920 = vmatpush1.bf16.msra.mxu0 %v795
        %921 = vmatprep.subr.bf16.mxu0 %v800
        %922 = vmatpush1.bf16.msra.mxu0 %v799
        %923 = vmatprep.subr.bf16.mxu0 %v804
        %924 = vmatpush1.bf16.msra.mxu0 %v803
        %925 = vmatprep.subr.bf16.mxu0 %v808
        %926 = vmatpush1.bf16.msra.mxu0 %v807
        %927 = vmatprep.subr.bf16.mxu0 %v812
        %928 = vmatpush1.bf16.msra.mxu0 %v811
        %929 = vmatprep.subr.bf16.mxu0 %v816
        %930 = vmatpush1.bf16.msra.mxu0 %v815
        %931 = vmatprep.subr.bf16.mxu0 %v820
        %932 = vmatpush1.bf16.msra.mxu0 %v819
        %933 = vmatprep.subr.bf16.mxu0 %v824
        %934 = vmatpush1.bf16.msra.mxu0 %v823
        %935 = vmatprep.subr.bf16.mxu0 %v828
        %936 = vmatpush1.bf16.msra.mxu0 %v827
        %937 = vmatprep.subr.bf16.mxu0 %v832
        %938 = vmatpush1.bf16.msra.mxu0 %v831
        %939 = vmatprep.subr.bf16.mxu0 %v836
        %940 = vmatpush1.bf16.msra.mxu0 %v835
        %941 = vmatprep.subr.bf16.mxu0 %v840
        %942 = vmatpush1.bf16.msra.mxu0 %v839
        %943 = vmatprep.subr.bf16.mxu0 %v844
        %944 = vmatpush1.bf16.msra.mxu0 %v843
        %945 = vmatprep.subr.bf16.mxu0 %v848
        %946 = vmatpush1.bf16.msra.mxu0 %v847
        %947 = vmatprep.mubr.bf16.mxu0 %v564
        %948 = vmatmul.mubr.bf16.gmra.mrb[0].mxu0 %v563
        %v949 = vpop.f32.mrb[0].mxu0
        %v950 = vadd.f32 %v498, %v949
        %v951 = vpop.f32.mrb[0].mxu0
        %v952 = vadd.f32 %v502, %v951
        %v953 = vpop.f32.mrb[0].mxu0
        %v954 = vadd.f32 %v498, %v953
        %v955 = vpop.f32.mrb[0].mxu0
        %v956 = vadd.f32 %v502, %v955
        %957 = vmatprep.mubr.bf16.mxu0 %v566
        %958 = vmatmul.mubr.bf16.gmra.mrb[0].mxu0 %v565
        %v959 = vpop.f32.mrb[0].mxu0
        %v960 = vadd.f32 %v498, %v959
        %v961 = vpop.f32.mrb[0].mxu0
        %v962 = vadd.f32 %v502, %v961
        %v963 = vpop.f32.mrb[0].mxu0
        %v964 = vadd.f32 %v498, %v963
        %v965 = vpop.f32.mrb[0].mxu0
        %v966 = vadd.f32 %v502, %v965
        %967 = vmatprep.mubr.bf16.mxu0 %v568
        %968 = vmatmul.mubr.bf16.gmra.mrb[0].mxu0 %v567
        %v969 = vpop.f32.mrb[0].mxu0
        %v970 = vadd.f32 %v498, %v969
        %v971 = vpop.f32.mrb[0].mxu0
        %v972 = vadd.f32 %v502, %v971
        %v973 = vpop.f32.mrb[0].mxu0
        %v974 = vadd.f32 %v498, %v973
        %v975 = vpop.f32.mrb[0].mxu0
        %v976 = vadd.f32 %v502, %v975
        %977 = vmatprep.mubr.bf16.mxu0 %v570
        %978 = vmatmul.mubr.bf16.gmra.mrb[0].mxu0 %v569
        %v979 = vpop.f32.mrb[0].mxu0
        %v980 = vadd.f32 %v498, %v979
        %v981 = vpop.f32.mrb[0].mxu0
        %v982 = vadd.f32 %v502, %v981
        %v983 = vpop.f32.mrb[0].mxu0
        %v984 = vadd.f32 %v498, %v983
        %v985 = vpop.f32.mrb[0].mxu0
        %v986 = vadd.f32 %v502, %v985
        %987 = vmatprep.mubr.bf16.mxu0 %v572
        %988 = vmatmul.mubr.bf16.gmra.mrb[0].mxu0 %v571
        %v989 = vpop.f32.mrb[0].mxu0
        %v990 = vadd.f32 %v498, %v989
        %v991 = vpop.f32.mrb[0].mxu0
        %v992 = vadd.f32 %v502, %v991
        %v993 = vpop.f32.mrb[0].mxu0
        %v994 = vadd.f32 %v498, %v993
        %v995 = vpop.f32.mrb[0].mxu0
        %v996 = vadd.f32 %v502, %v995
        %997 = vmatprep.mubr.bf16.mxu0 %v574
        %998 = vmatmul.mubr.bf16.gmra.mrb[0].mxu0 %v573
        %v999 = vpop.f32.mrb[0].mxu0
        %v1000 = vadd.f32 %v498, %v999
        %v1001 = vpop.f32.mrb[0].mxu0
        %v1002 = vadd.f32 %v502, %v1001
        %v1003 = vpop.f32.mrb[0].mxu0
        %v1004 = vadd.f32 %v498, %v1003
        %v1005 = vpop.f32.mrb[0].mxu0
        %v1006 = vadd.f32 %v502, %v1005
        %1007 = vmatprep.mubr.bf16.mxu0 %v576
        %1008 = vmatmul.mubr.bf16.gmra.mrb[0].mxu0 %v575
        %v1009 = vpop.f32.mrb[0].mxu0
        %v1010 = vadd.f32 %v498, %v1009
        %v1011 = vpop.f32.mrb[0].mxu0
        %v1012 = vadd.f32 %v502, %v1011
        %v1013 = vpop.f32.mrb[0].mxu0
        %v1014 = vadd.f32 %v498, %v1013
        %v1015 = vpop.f32.mrb[0].mxu0
        %v1016 = vadd.f32 %v502, %v1015
        %1017 = vmatprep.mubr.bf16.mxu0 %v578
        %1018 = vmatmul.mubr.bf16.gmra.mrb[0].mxu0 %v577
        %v1019 = vpop.f32.mrb[0].mxu0
        %v1020 = vadd.f32 %v498, %v1019
        %v1021 = vpop.f32.mrb[0].mxu0
        %v1022 = vadd.f32 %v502, %v1021
        %v1023 = vpop.f32.mrb[0].mxu0
        %v1024 = vadd.f32 %v498, %v1023
        %v1025 = vpop.f32.mrb[0].mxu0
        %v1026 = vadd.f32 %v502, %v1025
        %1027 = vdwg.mxu0
        %1028 = vmatprep.subr.bf16.mxu0 %v790
        %1029 = vmatpush1.bf16.msra.mxu0 %v789
        %1030 = vmatprep.subr.bf16.mxu0 %v794
        %1031 = vmatpush1.bf16.msra.mxu0 %v793
        %1032 = vmatprep.subr.bf16.mxu0 %v798
        %1033 = vmatpush1.bf16.msra.mxu0 %v797
        %1034 = vmatprep.subr.bf16.mxu0 %v802
        %1035 = vmatpush1.bf16.msra.mxu0 %v801
        %1036 = vmatprep.subr.bf16.mxu0 %v806
        %1037 = vmatpush1.bf16.msra.mxu0 %v805
        %1038 = vmatprep.subr.bf16.mxu0 %v810
        %1039 = vmatpush1.bf16.msra.mxu0 %v809
        %1040 = vmatprep.subr.bf16.mxu0 %v814
        %1041 = vmatpush1.bf16.msra.mxu0 %v813
        %1042 = vmatprep.subr.bf16.mxu0 %v818
        %1043 = vmatpush1.bf16.msra.mxu0 %v817
        %1044 = vmatprep.subr.bf16.mxu0 %v822
        %1045 = vmatpush1.bf16.msra.mxu0 %v821
        %1046 = vmatprep.subr.bf16.mxu0 %v826
        %1047 = vmatpush1.bf16.msra.mxu0 %v825
        %1048 = vmatprep.subr.bf16.mxu0 %v830
        %1049 = vmatpush1.bf16.msra.mxu0 %v829
        %1050 = vmatprep.subr.bf16.mxu0 %v834
        %1051 = vmatpush1.bf16.msra.mxu0 %v833
        %1052 = vmatprep.subr.bf16.mxu0 %v838
        %1053 = vmatpush1.bf16.msra.mxu0 %v837
        %1054 = vmatprep.subr.bf16.mxu0 %v842
        %1055 = vmatpush1.bf16.msra.mxu0 %v841
        %1056 = vmatprep.subr.bf16.mxu0 %v846
        %1057 = vmatpush1.bf16.msra.mxu0 %v845
        %1058 = vmatprep.subr.bf16.mxu0 %v850
        %1059 = vmatpush1.bf16.msra.mxu0 %v849
        %1060 = vmatprep.mubr.bf16.mxu0 %v564
        %1061 = vmatmul.mubr.bf16.gmra.mrb[0].mxu0 %v563
        %v1062 = vpop.f32.mrb[0].mxu0
        %v1063 = vadd.f32 %v506, %v1062
        %v1064 = vpop.f32.mrb[0].mxu0
        %v1065 = vadd.f32 %v510, %v1064
        %v1066 = vpop.f32.mrb[0].mxu0
        %v1067 = vadd.f32 %v506, %v1066
        %v1068 = vpop.f32.mrb[0].mxu0
        %v1069 = vadd.f32 %v510, %v1068
        %1070 = vmatprep.mubr.bf16.mxu0 %v566
        %1071 = vmatmul.mubr.bf16.gmra.mrb[0].mxu0 %v565
        %v1072 = vpop.f32.mrb[0].mxu0
        %v1073 = vadd.f32 %v506, %v1072
        %v1074 = vpop.f32.mrb[0].mxu0
        %v1075 = vadd.f32 %v510, %v1074
        %v1076 = vpop.f32.mrb[0].mxu0
        %v1077 = vadd.f32 %v506, %v1076
        %v1078 = vpop.f32.mrb[0].mxu0
        %v1079 = vadd.f32 %v510, %v1078
        %1080 = vmatprep.mubr.bf16.mxu0 %v568
        %1081 = vmatmul.mubr.bf16.gmra.mrb[0].mxu0 %v567
        %v1082 = vpop.f32.mrb[0].mxu0
        %v1083 = vadd.f32 %v506, %v1082
        %v1084 = vpop.f32.mrb[0].mxu0
        %v1085 = vadd.f32 %v510, %v1084
        %v1086 = vpop.f32.mrb[0].mxu0
        %v1087 = vadd.f32 %v506, %v1086
        %v1088 = vpop.f32.mrb[0].mxu0
        %v1089 = vadd.f32 %v510, %v1088
        %1090 = vmatprep.mubr.bf16.mxu0 %v570
        %1091 = vmatmul.mubr.bf16.gmra.mrb[0].mxu0 %v569
        %v1092 = vpop.f32.mrb[0].mxu0
        %v1093 = vadd.f32 %v506, %v1092
        %v1094 = vpop.f32.mrb[0].mxu0
        %v1095 = vadd.f32 %v510, %v1094
        %v1096 = vpop.f32.mrb[0].mxu0
        %v1097 = vadd.f32 %v506, %v1096
        %v1098 = vpop.f32.mrb[0].mxu0
        %v1099 = vadd.f32 %v510, %v1098
        %1100 = vmatprep.mubr.bf16.mxu0 %v572
        %1101 = vmatmul.mubr.bf16.gmra.mrb[0].mxu0 %v571
        %v1102 = vpop.f32.mrb[0].mxu0
        %v1103 = vadd.f32 %v506, %v1102
        %v1104 = vpop.f32.mrb[0].mxu0
        %v1105 = vadd.f32 %v510, %v1104
        %v1106 = vpop.f32.mrb[0].mxu0
        %v1107 = vadd.f32 %v506, %v1106
        %v1108 = vpop.f32.mrb[0].mxu0
        %v1109 = vadd.f32 %v510, %v1108
        %1110 = vmatprep.mubr.bf16.mxu0 %v574
        %1111 = vmatmul.mubr.bf16.gmra.mrb[0].mxu0 %v573
        %v1112 = vpop.f32.mrb[0].mxu0
        %v1113 = vadd.f32 %v506, %v1112
        %v1114 = vpop.f32.mrb[0].mxu0
        %v1115 = vadd.f32 %v510, %v1114
        %v1116 = vpop.f32.mrb[0].mxu0
        %v1117 = vadd.f32 %v506, %v1116
        %v1118 = vpop.f32.mrb[0].mxu0
        %v1119 = vadd.f32 %v510, %v1118
        %1120 = vmatprep.mubr.bf16.mxu0 %v576
        %1121 = vmatmul.mubr.bf16.gmra.mrb[0].mxu0 %v575
        %v1122 = vpop.f32.mrb[0].mxu0
        %v1123 = vadd.f32 %v506, %v1122
        %v1124 = vpop.f32.mrb[0].mxu0
        %v1125 = vadd.f32 %v510, %v1124
        %v1126 = vpop.f32.mrb[0].mxu0
        %v1127 = vadd.f32 %v506, %v1126
        %v1128 = vpop.f32.mrb[0].mxu0
        %v1129 = vadd.f32 %v510, %v1128
        %1130 = vmatprep.mubr.bf16.mxu0 %v578
        %1131 = vmatmul.mubr.bf16.gmra.mrb[0].mxu0 %v577
        %v1132 = vpop.f32.mrb[0].mxu0
        %v1133 = vadd.f32 %v506, %v1132
        %v1134 = vpop.f32.mrb[0].mxu0
        %v1135 = vadd.f32 %v510, %v1134
        %v1136 = vpop.f32.mrb[0].mxu0
        %v1137 = vadd.f32 %v506, %v1136
        %v1138 = vpop.f32.mrb[0].mxu0
        %v1139 = vadd.f32 %v510, %v1138
        %1140 = vdwg.mxu0
        %v1141 = vmax.f32 %v950, 0.0
        %v1142 = vmax.f32 %v952, 0.0
        %v1143 = vmax.f32 %v1063, 0.0
        %v1144 = vmax.f32 %v1065, 0.0
        %v1145 = vmax.f32 %v954, 0.0
        %v1146 = vmax.f32 %v956, 0.0
        %v1147 = vmax.f32 %v1067, 0.0
        %v1148 = vmax.f32 %v1069, 0.0
        %v1149 = vmax.f32 %v960, 0.0
        %v1150 = vmax.f32 %v962, 0.0
        %v1151 = vmax.f32 %v1073, 0.0
        %v1152 = vmax.f32 %v1075, 0.0
        %v1153 = vmax.f32 %v964, 0.0
        %v1154 = vmax.f32 %v966, 0.0
        %v1155 = vmax.f32 %v1077, 0.0
        %v1156 = vmax.f32 %v1079, 0.0
        %v1157 = vmax.f32 %v970, 0.0
        %v1158 = vmax.f32 %v972, 0.0
        %v1159 = vmax.f32 %v1083, 0.0
        %v1160 = vmax.f32 %v1085, 0.0
        %v1161 = vmax.f32 %v974, 0.0
        %v1162 = vmax.f32 %v976, 0.0
        %v1163 = vmax.f32 %v1087, 0.0
        %v1164 = vmax.f32 %v1089, 0.0
        %v1165 = vmax.f32 %v980, 0.0
        %v1166 = vmax.f32 %v982, 0.0
        %v1167 = vmax.f32 %v1093, 0.0
        %v1168 = vmax.f32 %v1095, 0.0
        %v1169 = vmax.f32 %v984, 0.0
        %v1170 = vmax.f32 %v986, 0.0
        %v1171 = vmax.f32 %v1097, 0.0
        %v1172 = vmax.f32 %v1099, 0.0
        %v1173 = vmax.f32 %v990, 0.0
        %v1174 = vmax.f32 %v992, 0.0
        %v1175 = vmax.f32 %v1103, 0.0
        %v1176 = vmax.f32 %v1105, 0.0
        %v1177 = vmax.f32 %v994, 0.0
        %v1178 = vmax.f32 %v996, 0.0
        %v1179 = vmax.f32 %v1107, 0.0
        %v1180 = vmax.f32 %v1109, 0.0
        %v1181 = vmax.f32 %v1000, 0.0
        %v1182 = vmax.f32 %v1002, 0.0
        %v1183 = vmax.f32 %v1113, 0.0
        %v1184 = vmax.f32 %v1115, 0.0
        %v1185 = vmax.f32 %v1004, 0.0
        %v1186 = vmax.f32 %v1006, 0.0
        %v1187 = vmax.f32 %v1117, 0.0
        %v1188 = vmax.f32 %v1119, 0.0
        %v1189 = vmax.f32 %v1010, 0.0
        %v1190 = vmax.f32 %v1012, 0.0
        %v1191 = vmax.f32 %v1123, 0.0
        %v1192 = vmax.f32 %v1125, 0.0
        %v1193 = vmax.f32 %v1014, 0.0
        %v1194 = vmax.f32 %v1016, 0.0
        %v1195 = vmax.f32 %v1127, 0.0
        %v1196 = vmax.f32 %v1129, 0.0
        %v1197 = vmax.f32 %v1020, 0.0
        %v1198 = vmax.f32 %v1022, 0.0
        %v1199 = vmax.f32 %v1133, 0.0
        %v1200 = vmax.f32 %v1135, 0.0
        %v1201 = vmax.f32 %v1024, 0.0
        %v1202 = vmax.f32 %v1026, 0.0
        %v1203 = vmax.f32 %v1137, 0.0
        %v1204 = vmax.f32 %v1139, 0.0
        %v1205 = vpack.c.bf16 %v1145, %v1141
        %v1206 = vpack.c.bf16 %v1146, %v1142
        %v1207 = vpack.c.bf16 %v1147, %v1143
        %v1208 = vpack.c.bf16 %v1148, %v1144
        %v1209 = vpack.c.bf16 %v1153, %v1149
        %v1210 = vpack.c.bf16 %v1154, %v1150
        %v1211 = vpack.c.bf16 %v1155, %v1151
        %v1212 = vpack.c.bf16 %v1156, %v1152
        %v1213 = vpack.c.bf16 %v1161, %v1157
        %v1214 = vpack.c.bf16 %v1162, %v1158
        %v1215 = vpack.c.bf16 %v1163, %v1159
        %v1216 = vpack.c.bf16 %v1164, %v1160
        %v1217 = vpack.c.bf16 %v1169, %v1165
        %v1218 = vpack.c.bf16 %v1170, %v1166
        %v1219 = vpack.c.bf16 %v1171, %v1167
        %v1220 = vpack.c.bf16 %v1172, %v1168
        %v1221 = vpack.c.bf16 %v1177, %v1173
        %v1222 = vpack.c.bf16 %v1178, %v1174
        %v1223 = vpack.c.bf16 %v1179, %v1175
        %v1224 = vpack.c.bf16 %v1180, %v1176
        %v1225 = vpack.c.bf16 %v1185, %v1181
        %v1226 = vpack.c.bf16 %v1186, %v1182
        %v1227 = vpack.c.bf16 %v1187, %v1183
        %v1228 = vpack.c.bf16 %v1188, %v1184
        %v1229 = vpack.c.bf16 %v1193, %v1189
        %v1230 = vpack.c.bf16 %v1194, %v1190
        %v1231 = vpack.c.bf16 %v1195, %v1191
        %v1232 = vpack.c.bf16 %v1196, %v1192
        %v1233 = vpack.c.bf16 %v1201, %v1197
        %v1234 = vpack.c.bf16 %v1202, %v1198
        %v1235 = vpack.c.bf16 %v1203, %v1199
        %v1236 = vpack.c.bf16 %v1204, %v1200
        %v1237 = vld [vmem:[#allocation7] sm:$0xff]
        %v1238 = vld [vmem:[#allocation7 + $0x8] sm:$0xff]
        %v1239 = vld [vmem:[#allocation7 + $0x10] sm:$0xff]
        %v1240 = vld [vmem:[#allocation7 + $0x18] sm:$0xff]
        %v1241 = vld [vmem:[#allocation7 + $0x20] sm:$0xff]
        %v1242 = vld [vmem:[#allocation7 + $0x28] sm:$0xff]
        %v1243 = vld [vmem:[#allocation7 + $0x30] sm:$0xff]
        %v1244 = vld [vmem:[#allocation7 + $0x38] sm:$0xff]
        %v1245 = vld [vmem:[#allocation7 + $0x40] sm:$0xff]
        %v1246 = vld [vmem:[#allocation7 + $0x48] sm:$0xff]
        %v1247 = vld [vmem:[#allocation7 + $0x50] sm:$0xff]
        %v1248 = vld [vmem:[#allocation7 + $0x58] sm:$0xff]
        %v1249 = vld [vmem:[#allocation7 + $0x60] sm:$0xff]
        %v1250 = vld [vmem:[#allocation7 + $0x68] sm:$0xff]
        %v1251 = vld [vmem:[#allocation7 + $0x70] sm:$0xff]
        %v1252 = vld [vmem:[#allocation7 + $0x78] sm:$0xff]
        %v1253 = vld [vmem:[#allocation7 + $0x80] sm:$0xff]
        %v1254 = vld [vmem:[#allocation7 + $0x88] sm:$0xff]
        %v1255 = vld [vmem:[#allocation7 + $0x90] sm:$0xff]
        %v1256 = vld [vmem:[#allocation7 + $0x98] sm:$0xff]
        %v1257 = vld [vmem:[#allocation7 + $0xa0] sm:$0xff]
        %v1258 = vld [vmem:[#allocation7 + $0xa8] sm:$0xff]
        %v1259 = vld [vmem:[#allocation7 + $0xb0] sm:$0xff]
        %v1260 = vld [vmem:[#allocation7 + $0xb8] sm:$0xff]
        %v1261 = vld [vmem:[#allocation7 + $0xc0] sm:$0xff]
        %v1262 = vld [vmem:[#allocation7 + $0xc8] sm:$0xff]
        %v1263 = vld [vmem:[#allocation7 + $0xd0] sm:$0xff]
        %v1264 = vld [vmem:[#allocation7 + $0xd8] sm:$0xff]
        %v1265 = vld [vmem:[#allocation7 + $0xe0] sm:$0xff]
        %v1266 = vld [vmem:[#allocation7 + $0xe8] sm:$0xff]
        %v1267 = vld [vmem:[#allocation7 + $0xf0] sm:$0xff]
        %v1268 = vld [vmem:[#allocation7 + $0xf8] sm:$0xff]
        %v1269 = vld [vmem:[#allocation7 + $0x100] sm:$0xff]
        %v1270 = vld [vmem:[#allocation7 + $0x108] sm:$0xff]
        %v1271 = vld [vmem:[#allocation7 + $0x110] sm:$0xff]
        %v1272 = vld [vmem:[#allocation7 + $0x118] sm:$0xff]
        %v1273 = vld [vmem:[#allocation7 + $0x120] sm:$0xff]
        %v1274 = vld [vmem:[#allocation7 + $0x128] sm:$0xff]
        %v1275 = vld [vmem:[#allocation7 + $0x130] sm:$0xff]
        %v1276 = vld [vmem:[#allocation7 + $0x138] sm:$0xff]
        %v1277 = vld [vmem:[#allocation7 + $0x140] sm:$0xff]
        %v1278 = vld [vmem:[#allocation7 + $0x148] sm:$0xff]
        %v1279 = vld [vmem:[#allocation7 + $0x150] sm:$0xff]
        %v1280 = vld [vmem:[#allocation7 + $0x158] sm:$0xff]
        %v1281 = vld [vmem:[#allocation7 + $0x160] sm:$0xff]
        %v1282 = vld [vmem:[#allocation7 + $0x168] sm:$0xff]
        %v1283 = vld [vmem:[#allocation7 + $0x170] sm:$0xff]
        %v1284 = vld [vmem:[#allocation7 + $0x178] sm:$0xff]
        %v1285 = vld [vmem:[#allocation7 + $0x180] sm:$0xff]
        %v1286 = vld [vmem:[#allocation7 + $0x188] sm:$0xff]
        %v1287 = vld [vmem:[#allocation7 + $0x190] sm:$0xff]
        %v1288 = vld [vmem:[#allocation7 + $0x198] sm:$0xff]
        %v1289 = vld [vmem:[#allocation7 + $0x1a0] sm:$0xff]
        %v1290 = vld [vmem:[#allocation7 + $0x1a8] sm:$0xff]
        %v1291 = vld [vmem:[#allocation7 + $0x1b0] sm:$0xff]
        %v1292 = vld [vmem:[#allocation7 + $0x1b8] sm:$0xff]
        %v1293 = vld [vmem:[#allocation7 + $0x1c0] sm:$0xff]
        %v1294 = vld [vmem:[#allocation7 + $0x1c8] sm:$0xff]
        %v1295 = vld [vmem:[#allocation7 + $0x1d0] sm:$0xff]
        %v1296 = vld [vmem:[#allocation7 + $0x1d8] sm:$0xff]
        %v1297 = vld [vmem:[#allocation7 + $0x1e0] sm:$0xff]
        %v1298 = vld [vmem:[#allocation7 + $0x1e8] sm:$0xff]
        %v1299 = vld [vmem:[#allocation7 + $0x1f0] sm:$0xff]
        %v1300 = vld [vmem:[#allocation7 + $0x1f8] sm:$0xff]
        %v1301 = vld [vmem:[%s4] sm:$0x3]
        %v1303 = vlaneseq
        %v1304 = vshrl.u32 %v1303, 7
        %v1305 = vsub.s32 0, %v1304
        %v1306 = vrot.slane %v1301, %v1305
        %v1307 = vlaneseq
        %v1308 = vshrl.u32 %v1307, 7
        %v1309 = vsub.s32 1, %v1308
        %v1310 = vrot.slane %v1301, %v1309
        %v1377 = vunpack.c.l.b16 %v1237
        %v1378 = vunpack.c.h.b16 %v1237
        %v1379 = vunpack.c.l.b16 %v1238
        %v1380 = vunpack.c.h.b16 %v1238
        %v1381 = vunpack.c.l.b16 %v1239
        %v1382 = vunpack.c.h.b16 %v1239
        %v1383 = vunpack.c.l.b16 %v1240
        %v1384 = vunpack.c.h.b16 %v1240
        %v1385 = vunpack.c.l.b16 %v1241
        %v1386 = vunpack.c.h.b16 %v1241
        %v1387 = vunpack.c.l.b16 %v1242
        %v1388 = vunpack.c.h.b16 %v1242
        %v1389 = vunpack.c.l.b16 %v1243
        %v1390 = vunpack.c.h.b16 %v1243
        %v1391 = vunpack.c.l.b16 %v1244
        %v1392 = vunpack.c.h.b16 %v1244
        %v1393 = vunpack.c.l.b16 %v1245
        %v1394 = vunpack.c.h.b16 %v1245
        %v1395 = vunpack.c.l.b16 %v1246
        %v1396 = vunpack.c.h.b16 %v1246
        %v1397 = vunpack.c.l.b16 %v1247
        %v1398 = vunpack.c.h.b16 %v1247
        %v1399 = vunpack.c.l.b16 %v1248
        %v1400 = vunpack.c.h.b16 %v1248
        %v1401 = vunpack.c.l.b16 %v1249
        %v1402 = vunpack.c.h.b16 %v1249
        %v1403 = vunpack.c.l.b16 %v1250
        %v1404 = vunpack.c.h.b16 %v1250
        %v1405 = vunpack.c.l.b16 %v1251
        %v1406 = vunpack.c.h.b16 %v1251
        %v1407 = vunpack.c.l.b16 %v1252
        %v1408 = vunpack.c.h.b16 %v1252
        %v1409 = vunpack.c.l.b16 %v1253
        %v1410 = vunpack.c.h.b16 %v1253
        %v1411 = vunpack.c.l.b16 %v1254
        %v1412 = vunpack.c.h.b16 %v1254
        %v1413 = vunpack.c.l.b16 %v1255
        %v1414 = vunpack.c.h.b16 %v1255
        %v1415 = vunpack.c.l.b16 %v1256
        %v1416 = vunpack.c.h.b16 %v1256
        %v1417 = vunpack.c.l.b16 %v1257
        %v1418 = vunpack.c.h.b16 %v1257
        %v1419 = vunpack.c.l.b16 %v1258
        %v1420 = vunpack.c.h.b16 %v1258
        %v1421 = vunpack.c.l.b16 %v1259
        %v1422 = vunpack.c.h.b16 %v1259
        %v1423 = vunpack.c.l.b16 %v1260
        %v1424 = vunpack.c.h.b16 %v1260
        %v1425 = vunpack.c.l.b16 %v1261
        %v1426 = vunpack.c.h.b16 %v1261
        %v1427 = vunpack.c.l.b16 %v1262
        %v1428 = vunpack.c.h.b16 %v1262
        %v1429 = vunpack.c.l.b16 %v1263
        %v1430 = vunpack.c.h.b16 %v1263
        %v1431 = vunpack.c.l.b16 %v1264
        %v1432 = vunpack.c.h.b16 %v1264
        %v1433 = vunpack.c.l.b16 %v1265
        %v1434 = vunpack.c.h.b16 %v1265
        %v1435 = vunpack.c.l.b16 %v1266
        %v1436 = vunpack.c.h.b16 %v1266
        %v1437 = vunpack.c.l.b16 %v1267
        %v1438 = vunpack.c.h.b16 %v1267
        %v1439 = vunpack.c.l.b16 %v1268
        %v1440 = vunpack.c.h.b16 %v1268
        %v1441 = vunpack.c.l.b16 %v1269
        %v1442 = vunpack.c.h.b16 %v1269
        %v1443 = vunpack.c.l.b16 %v1270
        %v1444 = vunpack.c.h.b16 %v1270
        %v1445 = vunpack.c.l.b16 %v1271
        %v1446 = vunpack.c.h.b16 %v1271
        %v1447 = vunpack.c.l.b16 %v1272
        %v1448 = vunpack.c.h.b16 %v1272
        %v1449 = vunpack.c.l.b16 %v1273
        %v1450 = vunpack.c.h.b16 %v1273
        %v1451 = vunpack.c.l.b16 %v1274
        %v1452 = vunpack.c.h.b16 %v1274
        %v1453 = vunpack.c.l.b16 %v1275
        %v1454 = vunpack.c.h.b16 %v1275
        %v1455 = vunpack.c.l.b16 %v1276
        %v1456 = vunpack.c.h.b16 %v1276
        %v1457 = vunpack.c.l.b16 %v1277
        %v1458 = vunpack.c.h.b16 %v1277
        %v1459 = vunpack.c.l.b16 %v1278
        %v1460 = vunpack.c.h.b16 %v1278
        %v1461 = vunpack.c.l.b16 %v1279
        %v1462 = vunpack.c.h.b16 %v1279
        %v1463 = vunpack.c.l.b16 %v1280
        %v1464 = vunpack.c.h.b16 %v1280
        %v1465 = vunpack.c.l.b16 %v1281
        %v1466 = vunpack.c.h.b16 %v1281
        %v1467 = vunpack.c.l.b16 %v1282
        %v1468 = vunpack.c.h.b16 %v1282
        %v1469 = vunpack.c.l.b16 %v1283
        %v1470 = vunpack.c.h.b16 %v1283
        %v1471 = vunpack.c.l.b16 %v1284
        %v1472 = vunpack.c.h.b16 %v1284
        %v1473 = vunpack.c.l.b16 %v1285
        %v1474 = vunpack.c.h.b16 %v1285
        %v1475 = vunpack.c.l.b16 %v1286
        %v1476 = vunpack.c.h.b16 %v1286
        %v1477 = vunpack.c.l.b16 %v1287
        %v1478 = vunpack.c.h.b16 %v1287
        %v1479 = vunpack.c.l.b16 %v1288
        %v1480 = vunpack.c.h.b16 %v1288
        %v1481 = vunpack.c.l.b16 %v1289
        %v1482 = vunpack.c.h.b16 %v1289
        %v1483 = vunpack.c.l.b16 %v1290
        %v1484 = vunpack.c.h.b16 %v1290
        %v1485 = vunpack.c.l.b16 %v1291
        %v1486 = vunpack.c.h.b16 %v1291
        %v1487 = vunpack.c.l.b16 %v1292
        %v1488 = vunpack.c.h.b16 %v1292
        %v1489 = vunpack.c.l.b16 %v1293
        %v1490 = vunpack.c.h.b16 %v1293
        %v1491 = vunpack.c.l.b16 %v1294
        %v1492 = vunpack.c.h.b16 %v1294
        %v1493 = vunpack.c.l.b16 %v1295
        %v1494 = vunpack.c.h.b16 %v1295
        %v1495 = vunpack.c.l.b16 %v1296
        %v1496 = vunpack.c.h.b16 %v1296
        %v1497 = vunpack.c.l.b16 %v1297
        %v1498 = vunpack.c.h.b16 %v1297
        %v1499 = vunpack.c.l.b16 %v1298
        %v1500 = vunpack.c.h.b16 %v1298
        %v1501 = vunpack.c.l.b16 %v1299
        %v1502 = vunpack.c.h.b16 %v1299
        %v1503 = vunpack.c.l.b16 %v1300
        %v1504 = vunpack.c.h.b16 %v1300
        %v1505 = vpack.c.b16 %v1379, %v1377
        %v1506 = vpack.c.b16 %v1380, %v1378
        %v1507 = vpack.c.b16 %v1383, %v1381
        %v1508 = vpack.c.b16 %v1384, %v1382
        %v1509 = vpack.c.b16 %v1387, %v1385
        %v1510 = vpack.c.b16 %v1388, %v1386
        %v1511 = vpack.c.b16 %v1391, %v1389
        %v1512 = vpack.c.b16 %v1392, %v1390
        %v1513 = vpack.c.b16 %v1395, %v1393
        %v1514 = vpack.c.b16 %v1396, %v1394
        %v1515 = vpack.c.b16 %v1399, %v1397
        %v1516 = vpack.c.b16 %v1400, %v1398
        %v1517 = vpack.c.b16 %v1403, %v1401
        %v1518 = vpack.c.b16 %v1404, %v1402
        %v1519 = vpack.c.b16 %v1407, %v1405
        %v1520 = vpack.c.b16 %v1408, %v1406
        %v1521 = vpack.c.b16 %v1411, %v1409
        %v1522 = vpack.c.b16 %v1412, %v1410
        %v1523 = vpack.c.b16 %v1415, %v1413
        %v1524 = vpack.c.b16 %v1416, %v1414
        %v1525 = vpack.c.b16 %v1419, %v1417
        %v1526 = vpack.c.b16 %v1420, %v1418
        %v1527 = vpack.c.b16 %v1423, %v1421
        %v1528 = vpack.c.b16 %v1424, %v1422
        %v1529 = vpack.c.b16 %v1427, %v1425
        %v1530 = vpack.c.b16 %v1428, %v1426
        %v1531 = vpack.c.b16 %v1431, %v1429
        %v1532 = vpack.c.b16 %v1432, %v1430
        %v1533 = vpack.c.b16 %v1435, %v1433
        %v1534 = vpack.c.b16 %v1436, %v1434
        %v1535 = vpack.c.b16 %v1439, %v1437
        %v1536 = vpack.c.b16 %v1440, %v1438
        %v1537 = vpack.c.b16 %v1443, %v1441
        %v1538 = vpack.c.b16 %v1444, %v1442
        %v1539 = vpack.c.b16 %v1447, %v1445
        %v1540 = vpack.c.b16 %v1448, %v1446
        %v1541 = vpack.c.b16 %v1451, %v1449
        %v1542 = vpack.c.b16 %v1452, %v1450
        %v1543 = vpack.c.b16 %v1455, %v1453
        %v1544 = vpack.c.b16 %v1456, %v1454
        %v1545 = vpack.c.b16 %v1459, %v1457
        %v1546 = vpack.c.b16 %v1460, %v1458
        %v1547 = vpack.c.b16 %v1463, %v1461
        %v1548 = vpack.c.b16 %v1464, %v1462
        %v1549 = vpack.c.b16 %v1467, %v1465
        %v1550 = vpack.c.b16 %v1468, %v1466
        %v1551 = vpack.c.b16 %v1471, %v1469
        %v1552 = vpack.c.b16 %v1472, %v1470
        %v1553 = vpack.c.b16 %v1475, %v1473
        %v1554 = vpack.c.b16 %v1476, %v1474
        %v1555 = vpack.c.b16 %v1479, %v1477
        %v1556 = vpack.c.b16 %v1480, %v1478
        %v1557 = vpack.c.b16 %v1483, %v1481
        %v1558 = vpack.c.b16 %v1484, %v1482
        %v1559 = vpack.c.b16 %v1487, %v1485
        %v1560 = vpack.c.b16 %v1488, %v1486
        %v1561 = vpack.c.b16 %v1491, %v1489
        %v1562 = vpack.c.b16 %v1492, %v1490
        %v1563 = vpack.c.b16 %v1495, %v1493
        %v1564 = vpack.c.b16 %v1496, %v1494
        %v1565 = vpack.c.b16 %v1499, %v1497
        %v1566 = vpack.c.b16 %v1500, %v1498
        %v1567 = vpack.c.b16 %v1503, %v1501
        %v1568 = vpack.c.b16 %v1504, %v1502
        %1633 = vmatprep.subr.bf16.mxu0 %v1506
        %1634 = vmatpush1.bf16.msra.mxu0 %v1505
        %1635 = vmatprep.subr.bf16.mxu0 %v1508
        %1636 = vmatpush1.bf16.msra.mxu0 %v1507
        %1637 = vmatprep.subr.bf16.mxu0 %v1510
        %1638 = vmatpush1.bf16.msra.mxu0 %v1509
        %1639 = vmatprep.subr.bf16.mxu0 %v1512
        %1640 = vmatpush1.bf16.msra.mxu0 %v1511
        %1641 = vmatprep.subr.bf16.mxu0 %v1514
        %1642 = vmatpush1.bf16.msra.mxu0 %v1513
        %1643 = vmatprep.subr.bf16.mxu0 %v1516
        %1644 = vmatpush1.bf16.msra.mxu0 %v1515
        %1645 = vmatprep.subr.bf16.mxu0 %v1518
        %1646 = vmatpush1.bf16.msra.mxu0 %v1517
        %1647 = vmatprep.subr.bf16.mxu0 %v1520
        %1648 = vmatpush1.bf16.msra.mxu0 %v1519
        %1649 = vmatprep.subr.bf16.mxu0 %v1522
        %1650 = vmatpush1.bf16.msra.mxu0 %v1521
        %1651 = vmatprep.subr.bf16.mxu0 %v1524
        %1652 = vmatpush1.bf16.msra.mxu0 %v1523
        %1653 = vmatprep.subr.bf16.mxu0 %v1526
        %1654 = vmatpush1.bf16.msra.mxu0 %v1525
        %1655 = vmatprep.subr.bf16.mxu0 %v1528
        %1656 = vmatpush1.bf16.msra.mxu0 %v1527
        %1657 = vmatprep.subr.bf16.mxu0 %v1530
        %1658 = vmatpush1.bf16.msra.mxu0 %v1529
        %1659 = vmatprep.subr.bf16.mxu0 %v1532
        %1660 = vmatpush1.bf16.msra.mxu0 %v1531
        %1661 = vmatprep.subr.bf16.mxu0 %v1534
        %1662 = vmatpush1.bf16.msra.mxu0 %v1533
        %1663 = vmatprep.subr.bf16.mxu0 %v1536
        %1664 = vmatpush1.bf16.msra.mxu0 %v1535
        %1665 = vmatprep.mubr.bf16.mxu0 %v1206
        %1666 = vmatmul.mubr.bf16.gmra.mrb[0].mxu0 %v1205
        %v1667 = vpop.f32.mrb[0].mxu0
        %v1668 = vadd.f32 %v1306, %v1667
        %v1669 = vpop.f32.mrb[0].mxu0
        %v1670 = vadd.f32 %v1310, %v1669
        %v1671 = vpop.f32.mrb[0].mxu0
        %v1672 = vadd.f32 %v1306, %v1671
        %v1673 = vpop.f32.mrb[0].mxu0
        %v1674 = vadd.f32 %v1310, %v1673
        %1675 = vmatprep.mubr.bf16.mxu0 %v1210
        %1676 = vmatmul.mubr.bf16.gmra.mrb[0].mxu0 %v1209
        %v1677 = vpop.f32.mrb[0].mxu0
        %v1678 = vadd.f32 %v1306, %v1677
        %v1679 = vpop.f32.mrb[0].mxu0
        %v1680 = vadd.f32 %v1310, %v1679
        %v1681 = vpop.f32.mrb[0].mxu0
        %v1682 = vadd.f32 %v1306, %v1681
        %v1683 = vpop.f32.mrb[0].mxu0
        %v1684 = vadd.f32 %v1310, %v1683
        %1685 = vmatprep.mubr.bf16.mxu0 %v1214
        %1686 = vmatmul.mubr.bf16.gmra.mrb[0].mxu0 %v1213
        %v1687 = vpop.f32.mrb[0].mxu0
        %v1688 = vadd.f32 %v1306, %v1687
        %v1689 = vpop.f32.mrb[0].mxu0
        %v1690 = vadd.f32 %v1310, %v1689
        %v1691 = vpop.f32.mrb[0].mxu0
        %v1692 = vadd.f32 %v1306, %v1691
        %v1693 = vpop.f32.mrb[0].mxu0
        %v1694 = vadd.f32 %v1310, %v1693
        %1695 = vmatprep.mubr.bf16.mxu0 %v1218
        %1696 = vmatmul.mubr.bf16.gmra.mrb[0].mxu0 %v1217
        %v1697 = vpop.f32.mrb[0].mxu0
        %v1698 = vadd.f32 %v1306, %v1697
        %v1699 = vpop.f32.mrb[0].mxu0
        %v1700 = vadd.f32 %v1310, %v1699
        %v1701 = vpop.f32.mrb[0].mxu0
        %v1702 = vadd.f32 %v1306, %v1701
        %v1703 = vpop.f32.mrb[0].mxu0
        %v1704 = vadd.f32 %v1310, %v1703
        %1705 = vmatprep.mubr.bf16.mxu0 %v1222
        %1706 = vmatmul.mubr.bf16.gmra.mrb[0].mxu0 %v1221
        %v1707 = vpop.f32.mrb[0].mxu0
        %v1708 = vadd.f32 %v1306, %v1707
        %v1709 = vpop.f32.mrb[0].mxu0
        %v1710 = vadd.f32 %v1310, %v1709
        %v1711 = vpop.f32.mrb[0].mxu0
        %v1712 = vadd.f32 %v1306, %v1711
        %v1713 = vpop.f32.mrb[0].mxu0
        %v1714 = vadd.f32 %v1310, %v1713
        %1715 = vmatprep.mubr.bf16.mxu0 %v1226
        %1716 = vmatmul.mubr.bf16.gmra.mrb[0].mxu0 %v1225
        %v1717 = vpop.f32.mrb[0].mxu0
        %v1718 = vadd.f32 %v1306, %v1717
        %v1719 = vpop.f32.mrb[0].mxu0
        %v1720 = vadd.f32 %v1310, %v1719
        %v1721 = vpop.f32.mrb[0].mxu0
        %v1722 = vadd.f32 %v1306, %v1721
        %v1723 = vpop.f32.mrb[0].mxu0
        %v1724 = vadd.f32 %v1310, %v1723
        %1725 = vmatprep.mubr.bf16.mxu0 %v1230
        %1726 = vmatmul.mubr.bf16.gmra.mrb[0].mxu0 %v1229
        %v1727 = vpop.f32.mrb[0].mxu0
        %v1728 = vadd.f32 %v1306, %v1727
        %v1729 = vpop.f32.mrb[0].mxu0
        %v1730 = vadd.f32 %v1310, %v1729
        %v1731 = vpop.f32.mrb[0].mxu0
        %v1732 = vadd.f32 %v1306, %v1731
        %v1733 = vpop.f32.mrb[0].mxu0
        %v1734 = vadd.f32 %v1310, %v1733
        %1735 = vmatprep.mubr.bf16.mxu0 %v1234
        %1736 = vmatmul.mubr.bf16.gmra.mrb[0].mxu0 %v1233
        %v1737 = vpop.f32.mrb[0].mxu0
        %v1738 = vadd.f32 %v1306, %v1737
        %v1739 = vpop.f32.mrb[0].mxu0
        %v1740 = vadd.f32 %v1310, %v1739
        %v1741 = vpop.f32.mrb[0].mxu0
        %v1742 = vadd.f32 %v1306, %v1741
        %v1743 = vpop.f32.mrb[0].mxu0
        %v1744 = vadd.f32 %v1310, %v1743
        %1745 = vdwg.mxu0
        %1746 = vmatprep.subr.bf16.mxu0 %v1538
        %1747 = vmatpush1.bf16.msra.mxu0 %v1537
        %1748 = vmatprep.subr.bf16.mxu0 %v1540
        %1749 = vmatpush1.bf16.msra.mxu0 %v1539
        %1750 = vmatprep.subr.bf16.mxu0 %v1542
        %1751 = vmatpush1.bf16.msra.mxu0 %v1541
        %1752 = vmatprep.subr.bf16.mxu0 %v1544
        %1753 = vmatpush1.bf16.msra.mxu0 %v1543
        %1754 = vmatprep.subr.bf16.mxu0 %v1546
        %1755 = vmatpush1.bf16.msra.mxu0 %v1545
        %1756 = vmatprep.subr.bf16.mxu0 %v1548
        %1757 = vmatpush1.bf16.msra.mxu0 %v1547
        %1758 = vmatprep.subr.bf16.mxu0 %v1550
        %1759 = vmatpush1.bf16.msra.mxu0 %v1549
        %1760 = vmatprep.subr.bf16.mxu0 %v1552
        %1761 = vmatpush1.bf16.msra.mxu0 %v1551
        %1762 = vmatprep.subr.bf16.mxu0 %v1554
        %1763 = vmatpush1.bf16.msra.mxu0 %v1553
        %1764 = vmatprep.subr.bf16.mxu0 %v1556
        %1765 = vmatpush1.bf16.msra.mxu0 %v1555
        %1766 = vmatprep.subr.bf16.mxu0 %v1558
        %1767 = vmatpush1.bf16.msra.mxu0 %v1557
        %1768 = vmatprep.subr.bf16.mxu0 %v1560
        %1769 = vmatpush1.bf16.msra.mxu0 %v1559
        %1770 = vmatprep.subr.bf16.mxu0 %v1562
        %1771 = vmatpush1.bf16.msra.mxu0 %v1561
        %1772 = vmatprep.subr.bf16.mxu0 %v1564
        %1773 = vmatpush1.bf16.msra.mxu0 %v1563
        %1774 = vmatprep.subr.bf16.mxu0 %v1566
        %1775 = vmatpush1.bf16.msra.mxu0 %v1565
        %1776 = vmatprep.subr.bf16.mxu0 %v1568
        %1777 = vmatpush1.bf16.msra.mxu0 %v1567
        %1778 = vmatprep.mubr.bf16.mxu0 %v1208
        %1779 = vmatmul.mubr.bf16.gmra.mrb[0].mxu0 %v1207
        %v1780 = vpop.f32.mrb[0].mxu0
        %v1781 = vadd.f32 %v1668, %v1780
        %v1782 = vpop.f32.mrb[0].mxu0
        %v1783 = vadd.f32 %v1670, %v1782
        %v1784 = vpop.f32.mrb[0].mxu0
        %v1785 = vadd.f32 %v1672, %v1784
        %v1786 = vpop.f32.mrb[0].mxu0
        %v1787 = vadd.f32 %v1674, %v1786
        %1788 = vmatprep.mubr.bf16.mxu0 %v1212
        %1789 = vmatmul.mubr.bf16.gmra.mrb[0].mxu0 %v1211
        %v1790 = vpop.f32.mrb[0].mxu0
        %v1791 = vadd.f32 %v1678, %v1790
        %v1792 = vpop.f32.mrb[0].mxu0
        %v1793 = vadd.f32 %v1680, %v1792
        %v1794 = vpop.f32.mrb[0].mxu0
        %v1795 = vadd.f32 %v1682, %v1794
        %v1796 = vpop.f32.mrb[0].mxu0
        %v1797 = vadd.f32 %v1684, %v1796
        %1798 = vmatprep.mubr.bf16.mxu0 %v1216
        %1799 = vmatmul.mubr.bf16.gmra.mrb[0].mxu0 %v1215
        %v1800 = vpop.f32.mrb[0].mxu0
        %v1801 = vadd.f32 %v1688, %v1800
        %v1802 = vpop.f32.mrb[0].mxu0
        %v1803 = vadd.f32 %v1690, %v1802
        %v1804 = vpop.f32.mrb[0].mxu0
        %v1805 = vadd.f32 %v1692, %v1804
        %v1806 = vpop.f32.mrb[0].mxu0
        %v1807 = vadd.f32 %v1694, %v1806
        %1808 = vmatprep.mubr.bf16.mxu0 %v1220
        %1809 = vmatmul.mubr.bf16.gmra.mrb[0].mxu0 %v1219
        %v1810 = vpop.f32.mrb[0].mxu0
        %v1811 = vadd.f32 %v1698, %v1810
        %v1812 = vpop.f32.mrb[0].mxu0
        %v1813 = vadd.f32 %v1700, %v1812
        %v1814 = vpop.f32.mrb[0].mxu0
        %v1815 = vadd.f32 %v1702, %v1814
        %v1816 = vpop.f32.mrb[0].mxu0
        %v1817 = vadd.f32 %v1704, %v1816
        %1818 = vmatprep.mubr.bf16.mxu0 %v1224
        %1819 = vmatmul.mubr.bf16.gmra.mrb[0].mxu0 %v1223
        %v1820 = vpop.f32.mrb[0].mxu0
        %v1821 = vadd.f32 %v1708, %v1820
        %v1822 = vpop.f32.mrb[0].mxu0
        %v1823 = vadd.f32 %v1710, %v1822
        %v1824 = vpop.f32.mrb[0].mxu0
        %v1825 = vadd.f32 %v1712, %v1824
        %v1826 = vpop.f32.mrb[0].mxu0
        %v1827 = vadd.f32 %v1714, %v1826
        %1828 = vmatprep.mubr.bf16.mxu0 %v1228
        %1829 = vmatmul.mubr.bf16.gmra.mrb[0].mxu0 %v1227
        %v1830 = vpop.f32.mrb[0].mxu0
        %v1831 = vadd.f32 %v1718, %v1830
        %v1832 = vpop.f32.mrb[0].mxu0
        %v1833 = vadd.f32 %v1720, %v1832
        %v1834 = vpop.f32.mrb[0].mxu0
        %v1835 = vadd.f32 %v1722, %v1834
        %v1836 = vpop.f32.mrb[0].mxu0
        %v1837 = vadd.f32 %v1724, %v1836
        %1838 = vmatprep.mubr.bf16.mxu0 %v1232
        %1839 = vmatmul.mubr.bf16.gmra.mrb[0].mxu0 %v1231
        %v1840 = vpop.f32.mrb[0].mxu0
        %v1841 = vadd.f32 %v1728, %v1840
        %v1842 = vpop.f32.mrb[0].mxu0
        %v1843 = vadd.f32 %v1730, %v1842
        %v1844 = vpop.f32.mrb[0].mxu0
        %v1845 = vadd.f32 %v1732, %v1844
        %v1846 = vpop.f32.mrb[0].mxu0
        %v1847 = vadd.f32 %v1734, %v1846
        %1848 = vmatprep.mubr.bf16.mxu0 %v1236
        %1849 = vmatmul.mubr.bf16.gmra.mrb[0].mxu0 %v1235
        %v1850 = vpop.f32.mrb[0].mxu0
        %v1851 = vadd.f32 %v1738, %v1850
        %v1852 = vpop.f32.mrb[0].mxu0
        %v1853 = vadd.f32 %v1740, %v1852
        %v1854 = vpop.f32.mrb[0].mxu0
        %v1855 = vadd.f32 %v1742, %v1854
        %v1856 = vpop.f32.mrb[0].mxu0
        %v1857 = vadd.f32 %v1744, %v1856
        %1858 = vdwg.mxu0
        %v1859 = vmax.f32 %v1781, 0.0
        %v1860 = vmax.f32 %v1783, 0.0
        %v1861 = vmax.f32 %v1785, 0.0
        %v1862 = vmax.f32 %v1787, 0.0
        %v1863 = vmax.f32 %v1791, 0.0
        %v1864 = vmax.f32 %v1793, 0.0
        %v1865 = vmax.f32 %v1795, 0.0
        %v1866 = vmax.f32 %v1797, 0.0
        %v1867 = vmax.f32 %v1801, 0.0
        %v1868 = vmax.f32 %v1803, 0.0
        %v1869 = vmax.f32 %v1805, 0.0
        %v1870 = vmax.f32 %v1807, 0.0
        %v1871 = vmax.f32 %v1811, 0.0
        %v1872 = vmax.f32 %v1813, 0.0
        %v1873 = vmax.f32 %v1815, 0.0
        %v1874 = vmax.f32 %v1817, 0.0
        %v1875 = vmax.f32 %v1821, 0.0
        %v1876 = vmax.f32 %v1823, 0.0
        %v1877 = vmax.f32 %v1825, 0.0
        %v1878 = vmax.f32 %v1827, 0.0
        %v1879 = vmax.f32 %v1831, 0.0
        %v1880 = vmax.f32 %v1833, 0.0
        %v1881 = vmax.f32 %v1835, 0.0
        %v1882 = vmax.f32 %v1837, 0.0
        %v1883 = vmax.f32 %v1841, 0.0
        %v1884 = vmax.f32 %v1843, 0.0
        %v1885 = vmax.f32 %v1845, 0.0
        %v1886 = vmax.f32 %v1847, 0.0
        %v1887 = vmax.f32 %v1851, 0.0
        %v1888 = vmax.f32 %v1853, 0.0
        %v1889 = vmax.f32 %v1855, 0.0
        %v1890 = vmax.f32 %v1857, 0.0
        %v1891 = vpack.c.bf16 %v1861, %v1859
        %v1892 = vpack.c.bf16 %v1862, %v1860
        %v1893 = vpack.c.bf16 %v1865, %v1863
        %v1894 = vpack.c.bf16 %v1866, %v1864
        %v1895 = vpack.c.bf16 %v1869, %v1867
        %v1896 = vpack.c.bf16 %v1870, %v1868
        %v1897 = vpack.c.bf16 %v1873, %v1871
        %v1898 = vpack.c.bf16 %v1874, %v1872
        %v1899 = vpack.c.bf16 %v1877, %v1875
        %v1900 = vpack.c.bf16 %v1878, %v1876
        %v1901 = vpack.c.bf16 %v1881, %v1879
        %v1902 = vpack.c.bf16 %v1882, %v1880
        %v1903 = vpack.c.bf16 %v1885, %v1883
        %v1904 = vpack.c.bf16 %v1886, %v1884
        %v1905 = vpack.c.bf16 %v1889, %v1887
        %v1906 = vpack.c.bf16 %v1890, %v1888
        %v1907 = vld [vmem:[#allocation8] sm:$0xf]
        %v1908 = vld [vmem:[#allocation8 + $0x4] sm:$0xf]
        %v1909 = vld [vmem:[#allocation8 + $0x8] sm:$0xf]
        %v1910 = vld [vmem:[#allocation8 + $0xc] sm:$0xf]
        %v1911 = vld [vmem:[#allocation8 + $0x10] sm:$0xf]
        %v1912 = vld [vmem:[#allocation8 + $0x14] sm:$0xf]
        %v1913 = vld [vmem:[#allocation8 + $0x18] sm:$0xf]
        %v1914 = vld [vmem:[#allocation8 + $0x1c] sm:$0xf]
        %v1915 = vld [vmem:[#allocation8 + $0x20] sm:$0xf]
        %v1916 = vld [vmem:[#allocation8 + $0x24] sm:$0xf]
        %v1917 = vld [vmem:[#allocation8 + $0x28] sm:$0xf]
        %v1918 = vld [vmem:[#allocation8 + $0x2c] sm:$0xf]
        %v1919 = vld [vmem:[#allocation8 + $0x30] sm:$0xf]
        %v1920 = vld [vmem:[#allocation8 + $0x34] sm:$0xf]
        %v1921 = vld [vmem:[#allocation8 + $0x38] sm:$0xf]
        %v1922 = vld [vmem:[#allocation8 + $0x3c] sm:$0xf]
        %v1923 = vld [vmem:[#allocation8 + $0x40] sm:$0xf]
        %v1924 = vld [vmem:[#allocation8 + $0x44] sm:$0xf]
        %v1925 = vld [vmem:[#allocation8 + $0x48] sm:$0xf]
        %v1926 = vld [vmem:[#allocation8 + $0x4c] sm:$0xf]
        %v1927 = vld [vmem:[#allocation8 + $0x50] sm:$0xf]
        %v1928 = vld [vmem:[#allocation8 + $0x54] sm:$0xf]
        %v1929 = vld [vmem:[#allocation8 + $0x58] sm:$0xf]
        %v1930 = vld [vmem:[#allocation8 + $0x5c] sm:$0xf]
        %v1931 = vld [vmem:[#allocation8 + $0x60] sm:$0xf]
        %v1932 = vld [vmem:[#allocation8 + $0x64] sm:$0xf]
        %v1933 = vld [vmem:[#allocation8 + $0x68] sm:$0xf]
        %v1934 = vld [vmem:[#allocation8 + $0x6c] sm:$0xf]
        %v1935 = vld [vmem:[#allocation8 + $0x70] sm:$0xf]
        %v1936 = vld [vmem:[#allocation8 + $0x74] sm:$0xf]
        %v1937 = vld [vmem:[#allocation8 + $0x78] sm:$0xf]
        %v1938 = vld [vmem:[#allocation8 + $0x7c] sm:$0xf]
        %v1939 = vld [vmem:[%s6] sm:$0x1]
        %v1941 = vlaneseq
        %v1942 = vshrl.u32 %v1941, 7
        %v1943 = vsub.s32 0, %v1942
        %v1944 = vrot.slane %v1939, %v1943
        %v1978 = vunpack.c.l.b16 %v1907
        %v1979 = vunpack.c.l.b16 %v1908
        %v1980 = vunpack.c.l.b16 %v1909
        %v1981 = vunpack.c.l.b16 %v1910
        %v1982 = vunpack.c.l.b16 %v1911
        %v1983 = vunpack.c.l.b16 %v1912
        %v1984 = vunpack.c.l.b16 %v1913
        %v1985 = vunpack.c.l.b16 %v1914
        %v1986 = vunpack.c.l.b16 %v1915
        %v1987 = vunpack.c.l.b16 %v1916
        %v1988 = vunpack.c.l.b16 %v1917
        %v1989 = vunpack.c.l.b16 %v1918
        %v1990 = vunpack.c.l.b16 %v1919
        %v1991 = vunpack.c.l.b16 %v1920
        %v1992 = vunpack.c.l.b16 %v1921
        %v1993 = vunpack.c.l.b16 %v1922
        %v1994 = vunpack.c.l.b16 %v1923
        %v1995 = vunpack.c.l.b16 %v1924
        %v1996 = vunpack.c.l.b16 %v1925
        %v1997 = vunpack.c.l.b16 %v1926
        %v1998 = vunpack.c.l.b16 %v1927
        %v1999 = vunpack.c.l.b16 %v1928
        %v2000 = vunpack.c.l.b16 %v1929
        %v2001 = vunpack.c.l.b16 %v1930
        %v2002 = vunpack.c.l.b16 %v1931
        %v2003 = vunpack.c.l.b16 %v1932
        %v2004 = vunpack.c.l.b16 %v1933
        %v2005 = vunpack.c.l.b16 %v1934
        %v2006 = vunpack.c.l.b16 %v1935
        %v2007 = vunpack.c.l.b16 %v1936
        %v2008 = vunpack.c.l.b16 %v1937
        %v2009 = vunpack.c.l.b16 %v1938
        %v2010 = vpack.c.b16 %v1979, %v1978
        %v2011 = vpack.c.b16 %v1981, %v1980
        %v2012 = vpack.c.b16 %v1983, %v1982
        %v2013 = vpack.c.b16 %v1985, %v1984
        %v2014 = vpack.c.b16 %v1987, %v1986
        %v2015 = vpack.c.b16 %v1989, %v1988
        %v2016 = vpack.c.b16 %v1991, %v1990
        %v2017 = vpack.c.b16 %v1993, %v1992
        %v2018 = vpack.c.b16 %v1995, %v1994
        %v2019 = vpack.c.b16 %v1997, %v1996
        %v2020 = vpack.c.b16 %v1999, %v1998
        %v2021 = vpack.c.b16 %v2001, %v2000
        %v2022 = vpack.c.b16 %v2003, %v2002
        %v2023 = vpack.c.b16 %v2005, %v2004
        %v2024 = vpack.c.b16 %v2007, %v2006
        %v2025 = vpack.c.b16 %v2009, %v2008
        %2042 = vmatprep.subr.bf16.mxu0 0
        %2043 = vmatpush1.bf16.msra.mxu0 %v2010
        %2044 = vmatprep.subr.bf16.mxu0 0
        %2045 = vmatpush1.bf16.msra.mxu0 %v2011
        %2046 = vmatprep.subr.bf16.mxu0 0
        %2047 = vmatpush1.bf16.msra.mxu0 %v2012
        %2048 = vmatprep.subr.bf16.mxu0 0
        %2049 = vmatpush1.bf16.msra.mxu0 %v2013
        %2050 = vmatprep.subr.bf16.mxu0 0
        %2051 = vmatpush1.bf16.msra.mxu0 %v2014
        %2052 = vmatprep.subr.bf16.mxu0 0
        %2053 = vmatpush1.bf16.msra.mxu0 %v2015
        %2054 = vmatprep.subr.bf16.mxu0 0
        %2055 = vmatpush1.bf16.msra.mxu0 %v2016
        %2056 = vmatprep.subr.bf16.mxu0 0
        %2057 = vmatpush1.bf16.msra.mxu0 %v2017
        %2058 = vmatprep.subr.bf16.mxu0 0
        %2059 = vmatpush1.bf16.msra.mxu0 %v2018
        %2060 = vmatprep.subr.bf16.mxu0 0
        %2061 = vmatpush1.bf16.msra.mxu0 %v2019
        %2062 = vmatprep.subr.bf16.mxu0 0
        %2063 = vmatpush1.bf16.msra.mxu0 %v2020
        %2064 = vmatprep.subr.bf16.mxu0 0
        %2065 = vmatpush1.bf16.msra.mxu0 %v2021
        %2066 = vmatprep.subr.bf16.mxu0 0
        %2067 = vmatpush1.bf16.msra.mxu0 %v2022
        %2068 = vmatprep.subr.bf16.mxu0 0
        %2069 = vmatpush1.bf16.msra.mxu0 %v2023
        %2070 = vmatprep.subr.bf16.mxu0 0
        %2071 = vmatpush1.bf16.msra.mxu0 %v2024
        %2072 = vmatprep.subr.bf16.mxu0 0
        %2073 = vmatpush1.bf16.msra.mxu0 %v2025
        %2074 = vmatprep.mubr.bf16.mxu0 %v1892
        %2075 = vmatmul.mubr.bf16.gmra.mrb[0].mxu0 %v1891
        %v2076 = vpop.f32.mrb[0].mxu0
        %v2077 = vadd.f32 %v1944, %v2076
        %v2078 = vpop.f32.mrb[0].mxu0
        %v2079 = vpop.f32.mrb[0].mxu0
        %v2080 = vadd.f32 %v1944, %v2079
        %v2081 = vpop.f32.mrb[0].mxu0
        %2082 = vmatprep.mubr.bf16.mxu0 %v1894
        %2083 = vmatmul.mubr.bf16.gmra.mrb[0].mxu0 %v1893
        %v2084 = vpop.f32.mrb[0].mxu0
        %v2085 = vadd.f32 %v1944, %v2084
        %v2086 = vpop.f32.mrb[0].mxu0
        %v2087 = vpop.f32.mrb[0].mxu0
        %v2088 = vadd.f32 %v1944, %v2087
        %v2089 = vpop.f32.mrb[0].mxu0
        %2090 = vmatprep.mubr.bf16.mxu0 %v1896
        %2091 = vmatmul.mubr.bf16.gmra.mrb[0].mxu0 %v1895
        %v2092 = vpop.f32.mrb[0].mxu0
        %v2093 = vadd.f32 %v1944, %v2092
        %v2094 = vpop.f32.mrb[0].mxu0
        %v2095 = vpop.f32.mrb[0].mxu0
        %v2096 = vadd.f32 %v1944, %v2095
        %v2097 = vpop.f32.mrb[0].mxu0
        %2098 = vmatprep.mubr.bf16.mxu0 %v1898
        %2099 = vmatmul.mubr.bf16.gmra.mrb[0].mxu0 %v1897
        %v2100 = vpop.f32.mrb[0].mxu0
        %v2101 = vadd.f32 %v1944, %v2100
        %v2102 = vpop.f32.mrb[0].mxu0
        %v2103 = vpop.f32.mrb[0].mxu0
        %v2104 = vadd.f32 %v1944, %v2103
        %v2105 = vpop.f32.mrb[0].mxu0
        %2106 = vmatprep.mubr.bf16.mxu0 %v1900
        %2107 = vmatmul.mubr.bf16.gmra.mrb[0].mxu0 %v1899
        %v2108 = vpop.f32.mrb[0].mxu0
        %v2109 = vadd.f32 %v1944, %v2108
        %v2110 = vpop.f32.mrb[0].mxu0
        %v2111 = vpop.f32.mrb[0].mxu0
        %v2112 = vadd.f32 %v1944, %v2111
        %v2113 = vpop.f32.mrb[0].mxu0
        %2114 = vmatprep.mubr.bf16.mxu0 %v1902
        %2115 = vmatmul.mubr.bf16.gmra.mrb[0].mxu0 %v1901
        %v2116 = vpop.f32.mrb[0].mxu0
        %v2117 = vadd.f32 %v1944, %v2116
        %v2118 = vpop.f32.mrb[0].mxu0
        %v2119 = vpop.f32.mrb[0].mxu0
        %v2120 = vadd.f32 %v1944, %v2119
        %v2121 = vpop.f32.mrb[0].mxu0
        %2122 = vmatprep.mubr.bf16.mxu0 %v1904
        %2123 = vmatmul.mubr.bf16.gmra.mrb[0].mxu0 %v1903
        %v2124 = vpop.f32.mrb[0].mxu0
        %v2125 = vadd.f32 %v1944, %v2124
        %v2126 = vpop.f32.mrb[0].mxu0
        %v2127 = vpop.f32.mrb[0].mxu0
        %v2128 = vadd.f32 %v1944, %v2127
        %v2129 = vpop.f32.mrb[0].mxu0
        %2130 = vmatprep.mubr.bf16.mxu0 %v1906
        %2131 = vmatmul.mubr.bf16.gmra.mrb[0].mxu0 %v1905
        %v2132 = vpop.f32.mrb[0].mxu0
        %v2133 = vadd.f32 %v1944, %v2132
        %v2134 = vpop.f32.mrb[0].mxu0
        %v2135 = vpop.f32.mrb[0].mxu0
        %v2136 = vadd.f32 %v1944, %v2135
        %v2137 = vpop.f32.mrb[0].mxu0
        %2138 = vdwg.mxu0
        %v2139 = vmax.f32 %v2077, 0.0
        %v2140 = vmax.f32 %v2080, 0.0
        %v2141 = vmax.f32 %v2085, 0.0
        %v2142 = vmax.f32 %v2088, 0.0
        %v2143 = vmax.f32 %v2093, 0.0
        %v2144 = vmax.f32 %v2096, 0.0
        %v2145 = vmax.f32 %v2101, 0.0
        %v2146 = vmax.f32 %v2104, 0.0
        %v2147 = vmax.f32 %v2109, 0.0
        %v2148 = vmax.f32 %v2112, 0.0
        %v2149 = vmax.f32 %v2117, 0.0
        %v2150 = vmax.f32 %v2120, 0.0
        %v2151 = vmax.f32 %v2125, 0.0
        %v2152 = vmax.f32 %v2128, 0.0
        %v2153 = vmax.f32 %v2133, 0.0
        %v2154 = vmax.f32 %v2136, 0.0
        %v2155 = vpack.c.bf16 %v2140, %v2139
        %v2156 = vpack.c.bf16 %v2142, %v2141
        %v2157 = vpack.c.bf16 %v2144, %v2143
        %v2158 = vpack.c.bf16 %v2146, %v2145
        %v2159 = vpack.c.bf16 %v2148, %v2147
        %v2160 = vpack.c.bf16 %v2150, %v2149
        %v2161 = vpack.c.bf16 %v2152, %v2151
        %v2162 = vpack.c.bf16 %v2154, %v2153
        %v2163 = vld [vmem:[#allocation10] sm:$0xf]
        %v2164 = vld [vmem:[#allocation10 + $0x4] sm:$0xf]
        %v2165 = vld [vmem:[#allocation10 + $0x8] sm:$0xf]
        %v2166 = vld [vmem:[#allocation10 + $0xc] sm:$0xf]
        %v2167 = vld [vmem:[#allocation10 + $0x10] sm:$0xf]
        %v2168 = vld [vmem:[#allocation10 + $0x14] sm:$0xf]
        %v2169 = vld [vmem:[#allocation10 + $0x18] sm:$0xf]
        %v2170 = vld [vmem:[#allocation10 + $0x1c] sm:$0xf]
        %v2171 = vld [vmem:[#allocation10 + $0x20] sm:$0xf]
        %v2172 = vld [vmem:[#allocation10 + $0x24] sm:$0xf]
        %v2173 = vld [vmem:[#allocation10 + $0x28] sm:$0xf]
        %v2174 = vld [vmem:[#allocation10 + $0x2c] sm:$0xf]
        %v2175 = vld [vmem:[#allocation10 + $0x30] sm:$0xf]
        %v2176 = vld [vmem:[#allocation10 + $0x34] sm:$0xf]
        %v2177 = vld [vmem:[#allocation10 + $0x38] sm:$0xf]
        %v2178 = vld [vmem:[#allocation10 + $0x3c] sm:$0xf]
        %v2179 = vld [vmem:[%s8] sm:$0x1]
        %v2181 = vlaneseq
        %v2182 = vshrl.u32 %v2181, 7
        %v2183 = vsub.s32 0, %v2182
        %v2184 = vrot.slane %v2179, %v2183
        %v2202 = vunpack.c.l.b16 %v2163
        %v2203 = vunpack.c.l.b16 %v2164
        %v2204 = vunpack.c.l.b16 %v2165
        %v2205 = vunpack.c.l.b16 %v2166
        %v2206 = vunpack.c.l.b16 %v2167
        %v2207 = vunpack.c.l.b16 %v2168
        %v2208 = vunpack.c.l.b16 %v2169
        %v2209 = vunpack.c.l.b16 %v2170
        %v2210 = vunpack.c.l.b16 %v2171
        %v2211 = vunpack.c.l.b16 %v2172
        %v2212 = vunpack.c.l.b16 %v2173
        %v2213 = vunpack.c.l.b16 %v2174
        %v2214 = vunpack.c.l.b16 %v2175
        %v2215 = vunpack.c.l.b16 %v2176
        %v2216 = vunpack.c.l.b16 %v2177
        %v2217 = vunpack.c.l.b16 %v2178
        %v2218 = vpack.c.b16 %v2203, %v2202
        %v2219 = vpack.c.b16 %v2205, %v2204
        %v2220 = vpack.c.b16 %v2207, %v2206
        %v2221 = vpack.c.b16 %v2209, %v2208
        %v2222 = vpack.c.b16 %v2211, %v2210
        %v2223 = vpack.c.b16 %v2213, %v2212
        %v2224 = vpack.c.b16 %v2215, %v2214
        %v2225 = vpack.c.b16 %v2217, %v2216
        %2234 = vmatprep.subr.bf16.mxu0 0
        %2235 = vmatpush1.bf16.msra.mxu0 %v2218
        %2236 = vmatprep.subr.bf16.mxu0 0
        %2237 = vmatpush1.bf16.msra.mxu0 %v2219
        %2238 = vmatprep.subr.bf16.mxu0 0
        %2239 = vmatpush1.bf16.msra.mxu0 %v2220
        %2240 = vmatprep.subr.bf16.mxu0 0
        %2241 = vmatpush1.bf16.msra.mxu0 %v2221
        %2242 = vmatprep.subr.bf16.mxu0 0
        %2243 = vmatpush1.bf16.msra.mxu0 %v2222
        %2244 = vmatprep.subr.bf16.mxu0 0
        %2245 = vmatpush1.bf16.msra.mxu0 %v2223
        %2246 = vmatprep.subr.bf16.mxu0 0
        %2247 = vmatpush1.bf16.msra.mxu0 %v2224
        %2248 = vmatprep.subr.bf16.mxu0 0
        %2249 = vmatpush1.bf16.msra.mxu0 %v2225
        %2250 = vmatprep.subr.bf16.mxu0 0
        %2251 = vmatpush1.bf16.msra.mxu0 0
        %2252 = vmatprep.subr.bf16.mxu0 0
        %2253 = vmatpush1.bf16.msra.mxu0 0
        %2254 = vmatprep.subr.bf16.mxu0 0
        %2255 = vmatpush1.bf16.msra.mxu0 0
        %2256 = vmatprep.subr.bf16.mxu0 0
        %2257 = vmatpush1.bf16.msra.mxu0 0
        %2258 = vmatprep.subr.bf16.mxu0 0
        %2259 = vmatpush1.bf16.msra.mxu0 0
        %2260 = vmatprep.subr.bf16.mxu0 0
        %2261 = vmatpush1.bf16.msra.mxu0 0
        %2262 = vmatprep.subr.bf16.mxu0 0
        %2263 = vmatpush1.bf16.msra.mxu0 0
        %2264 = vmatprep.subr.bf16.mxu0 0
        %2265 = vmatpush1.bf16.msra.mxu0 0
        %2266 = vmatprep.mubr.bf16.mxu0 0
        %2267 = vmatmul.mubr.bf16.gmra.mrb[0].mxu0 %v2155
        %v2268 = vpop.f32.mrb[0].mxu0
        %v2269 = vadd.f32 %v2184, %v2268
        %v2270 = vpop.f32.mrb[0].mxu0
        %v2271 = vpop.f32.mrb[0].mxu0
        %v2272 = vadd.f32 %v2184, %v2271
        %v2273 = vpop.f32.mrb[0].mxu0
        %2274 = vmatprep.mubr.bf16.mxu0 0
        %2275 = vmatmul.mubr.bf16.gmra.mrb[0].mxu0 %v2156
        %v2276 = vpop.f32.mrb[0].mxu0
        %v2277 = vadd.f32 %v2184, %v2276
        %v2278 = vpop.f32.mrb[0].mxu0
        %v2279 = vpop.f32.mrb[0].mxu0
        %v2280 = vadd.f32 %v2184, %v2279
        %v2281 = vpop.f32.mrb[0].mxu0
        %2282 = vmatprep.mubr.bf16.mxu0 0
        %2283 = vmatmul.mubr.bf16.gmra.mrb[0].mxu0 %v2157
        %v2284 = vpop.f32.mrb[0].mxu0
        %v2285 = vadd.f32 %v2184, %v2284
        %v2286 = vpop.f32.mrb[0].mxu0
        %v2287 = vpop.f32.mrb[0].mxu0
        %v2288 = vadd.f32 %v2184, %v2287
        %v2289 = vpop.f32.mrb[0].mxu0
        %2290 = vmatprep.mubr.bf16.mxu0 0
        %2291 = vmatmul.mubr.bf16.gmra.mrb[0].mxu0 %v2158
        %v2292 = vpop.f32.mrb[0].mxu0
        %v2293 = vadd.f32 %v2184, %v2292
        %v2294 = vpop.f32.mrb[0].mxu0
        %v2295 = vpop.f32.mrb[0].mxu0
        %v2296 = vadd.f32 %v2184, %v2295
        %v2297 = vpop.f32.mrb[0].mxu0
        %2298 = vmatprep.mubr.bf16.mxu0 0
        %2299 = vmatmul.mubr.bf16.gmra.mrb[0].mxu0 %v2159
        %v2300 = vpop.f32.mrb[0].mxu0
        %v2301 = vadd.f32 %v2184, %v2300
        %v2302 = vpop.f32.mrb[0].mxu0
        %v2303 = vpop.f32.mrb[0].mxu0
        %v2304 = vadd.f32 %v2184, %v2303
        %v2305 = vpop.f32.mrb[0].mxu0
        %2306 = vmatprep.mubr.bf16.mxu0 0
        %2307 = vmatmul.mubr.bf16.gmra.mrb[0].mxu0 %v2160
        %v2308 = vpop.f32.mrb[0].mxu0
        %v2309 = vadd.f32 %v2184, %v2308
        %v2310 = vpop.f32.mrb[0].mxu0
        %v2311 = vpop.f32.mrb[0].mxu0
        %v2312 = vadd.f32 %v2184, %v2311
        %v2313 = vpop.f32.mrb[0].mxu0
        %2314 = vmatprep.mubr.bf16.mxu0 0
        %2315 = vmatmul.mubr.bf16.gmra.mrb[0].mxu0 %v2161
        %v2316 = vpop.f32.mrb[0].mxu0
        %v2317 = vadd.f32 %v2184, %v2316
        %v2318 = vpop.f32.mrb[0].mxu0
        %v2319 = vpop.f32.mrb[0].mxu0
        %v2320 = vadd.f32 %v2184, %v2319
        %v2321 = vpop.f32.mrb[0].mxu0
        %2322 = vmatprep.mubr.bf16.mxu0 0
        %2323 = vmatmul.mubr.bf16.gmra.mrb[0].mxu0 %v2162
        %v2324 = vpop.f32.mrb[0].mxu0
        %v2325 = vadd.f32 %v2184, %v2324
        %v2326 = vpop.f32.mrb[0].mxu0
        %v2327 = vpop.f32.mrb[0].mxu0
        %v2328 = vadd.f32 %v2184, %v2327
        %v2329 = vpop.f32.mrb[0].mxu0
        %2330 = vdwg.mxu0
        %v2331 = vxor.u32 %v2269, 2147483648
        %v2332 = vxor.u32 %v2272, 2147483648
        %v2333 = vxor.u32 %v2277, 2147483648
        %v2334 = vxor.u32 %v2280, 2147483648
        %v2335 = vxor.u32 %v2285, 2147483648
        %v2336 = vxor.u32 %v2288, 2147483648
        %v2337 = vxor.u32 %v2293, 2147483648
        %v2338 = vxor.u32 %v2296, 2147483648
        %v2339 = vxor.u32 %v2301, 2147483648
        %v2340 = vxor.u32 %v2304, 2147483648
        %v2341 = vxor.u32 %v2309, 2147483648
        %v2342 = vxor.u32 %v2312, 2147483648
        %v2343 = vxor.u32 %v2317, 2147483648
        %v2344 = vxor.u32 %v2320, 2147483648
        %v2345 = vxor.u32 %v2325, 2147483648
        %v2346 = vxor.u32 %v2328, 2147483648
        %v2347 = vmul.f32 %v2331, 1.442695
        %v2348 = vpow.pop %v2347
        %v2349 = vmul.f32 %v2332, 1.442695
        %v2350 = vpow.pop %v2349
        %v2351 = vmul.f32 %v2333, 1.442695
        %v2352 = vpow.pop %v2351
        %v2353 = vmul.f32 %v2334, 1.442695
        %v2354 = vpow.pop %v2353
        %v2355 = vmul.f32 %v2335, 1.442695
        %v2356 = vpow.pop %v2355
        %v2357 = vmul.f32 %v2336, 1.442695
        %v2358 = vpow.pop %v2357
        %v2359 = vmul.f32 %v2337, 1.442695
        %v2360 = vpow.pop %v2359
        %v2361 = vmul.f32 %v2338, 1.442695
        %v2362 = vpow.pop %v2361
        %v2363 = vmul.f32 %v2339, 1.442695
        %v2364 = vpow.pop %v2363
        %v2365 = vmul.f32 %v2340, 1.442695
        %v2366 = vpow.pop %v2365
        %v2367 = vmul.f32 %v2341, 1.442695
        %v2368 = vpow.pop %v2367
        %v2369 = vmul.f32 %v2342, 1.442695
        %v2370 = vpow.pop %v2369
        %v2371 = vmul.f32 %v2343, 1.442695
        %v2372 = vpow.pop %v2371
        %v2373 = vmul.f32 %v2344, 1.442695
        %v2374 = vpow.pop %v2373
        %v2375 = vmul.f32 %v2345, 1.442695
        %v2376 = vpow.pop %v2375
        %v2377 = vmul.f32 %v2346, 1.442695
        %v2378 = vpow.pop %v2377
        %v2379 = vadd.f32 %v2348, 1.0
        %v2380 = vadd.f32 %v2350, 1.0
        %v2381 = vadd.f32 %v2352, 1.0
        %v2382 = vadd.f32 %v2354, 1.0
        %v2383 = vadd.f32 %v2356, 1.0
        %v2384 = vadd.f32 %v2358, 1.0
        %v2385 = vadd.f32 %v2360, 1.0
        %v2386 = vadd.f32 %v2362, 1.0
        %v2387 = vadd.f32 %v2364, 1.0
        %v2388 = vadd.f32 %v2366, 1.0
        %v2389 = vadd.f32 %v2368, 1.0
        %v2390 = vadd.f32 %v2370, 1.0
        %v2391 = vadd.f32 %v2372, 1.0
        %v2392 = vadd.f32 %v2374, 1.0
        %v2393 = vadd.f32 %v2376, 1.0
        %v2394 = vadd.f32 %v2378, 1.0
        %v2395 = vrcp.pop %v2379
        %v2396 = vmul.f32 1.0, %v2395
        %v2397 = vrcp.pop %v2380
        %v2398 = vmul.f32 1.0, %v2397
        %v2399 = vrcp.pop %v2381
        %v2400 = vmul.f32 1.0, %v2399
        %v2401 = vrcp.pop %v2382
        %v2402 = vmul.f32 1.0, %v2401
        %v2403 = vrcp.pop %v2383
        %v2404 = vmul.f32 1.0, %v2403
        %v2405 = vrcp.pop %v2384
        %v2406 = vmul.f32 1.0, %v2405
        %v2407 = vrcp.pop %v2385
        %v2408 = vmul.f32 1.0, %v2407
        %v2409 = vrcp.pop %v2386
        %v2410 = vmul.f32 1.0, %v2409
        %v2411 = vrcp.pop %v2387
        %v2412 = vmul.f32 1.0, %v2411
        %v2413 = vrcp.pop %v2388
        %v2414 = vmul.f32 1.0, %v2413
        %v2415 = vrcp.pop %v2389
        %v2416 = vmul.f32 1.0, %v2415
        %v2417 = vrcp.pop %v2390
        %v2418 = vmul.f32 1.0, %v2417
        %v2419 = vrcp.pop %v2391
        %v2420 = vmul.f32 1.0, %v2419
        %v2421 = vrcp.pop %v2392
        %v2422 = vmul.f32 1.0, %v2421
        %v2423 = vrcp.pop %v2393
        %v2424 = vmul.f32 1.0, %v2423
        %v2425 = vrcp.pop %v2394
        %v2426 = vmul.f32 1.0, %v2425
        %2427 = vst [vmem:[%s409] sm:$0xff] %v2396
        %2428 = vst [vmem:[%s409 + $0x8] sm:$0xff] %v2398
        %2429 = vst [vmem:[%s409 + $0x10] sm:$0xff] %v2400
        %2430 = vst [vmem:[%s409 + $0x18] sm:$0xff] %v2402
        %2431 = vst [vmem:[%s409 + $0x20] sm:$0xff] %v2404
        %2432 = vst [vmem:[%s409 + $0x28] sm:$0xff] %v2406
        %2433 = vst [vmem:[%s409 + $0x30] sm:$0xff] %v2408
        %2434 = vst [vmem:[%s409 + $0x38] sm:$0xff] %v2410
        %2435 = vst [vmem:[%s409 + $0x40] sm:$0xff] %v2412
        %2436 = vst [vmem:[%s409 + $0x48] sm:$0xff] %v2414
        %2437 = vst [vmem:[%s409 + $0x50] sm:$0xff] %v2416
        %2438 = vst [vmem:[%s409 + $0x58] sm:$0xff] %v2418
        %2439 = vst [vmem:[%s409 + $0x60] sm:$0xff] %v2420
        %2440 = vst [vmem:[%s409 + $0x68] sm:$0xff] %v2422
        %2441 = vst [vmem:[%s409 + $0x70] sm:$0xff] %v2424
        %2442 = vst [vmem:[%s409 + $0x78] sm:$0xff] %v2426
        %s2443 = sand.u32 %s230, 1
        %s2444 = scalar_lea.sflag [#allocation4], %s2443
        %s2445 = sand.u32 %s230, 1
        %s2446 = smul.addr %s2445, 128
        %s2447 = scalar_lea.vmem [#allocation11], %s2446
        // Predicated region
        $region77: #{tpu_custom_call.1} parent=55 // pred_check
          %p2448 = pneg %p240
        $region78: #{tpu_custom_call.1} parent=55 // pred_check_branch
          %2450 = sbr.rel (%p2448) target = $region80
        $region79: #{tpu_custom_call.1} parent=55 // pred_region
          %s2451 = smul.u32 16, %s28
          %s2453 = ssub.s32 2048, 2048
          %2454 = vsyncadd %s2444, %s2453
          %s2455 = smul.addr %s2451, 128
          %s2456 = scalar_lea.hbm %s9, %s2455
          %s2457 = sshll.u32 %s2447, 4
          %s2458 = int_to_ptr.vmem [resolvable:$true] %s2457
          %2463 = dma.vmem_to_hbm [thread:$0]  %s2458, 2048, %s2456, %s2444, 128, 128, 8
        $region80: #{tpu_custom_call.1} parent=55 // pred_fallthru
          _
      $region56: #{tpu_custom_call.1} parent=5 // pred_fallthru
        _
      %p2464 = scmp.le.s32.totalorder 2, %s23
      // Predicated region
      $region81: #{tpu_custom_call.1} parent=5 // pred_check
        %p2465 = pneg %p2464
      $region82: #{tpu_custom_call.1} parent=5 // pred_check_branch
        %2467 = sbr.rel (%p2465) target = $region84
      $region83: #{tpu_custom_call.1} parent=5 // pred_region
        %s2468 = ssub.s32 %s23, 2
        // Predicated region
        $region85: #{tpu_custom_call.1} parent=83 // pred_check
          %p2469 = pneg %p246
        $region86: #{tpu_custom_call.1} parent=83 // pred_check_branch
          %2471 = sbr.rel (%p2469) target = $region88
        $region87: #{tpu_custom_call.1} parent=83 // pred_region
          %s2472 = sand.u32 %s231, 1
          %s2473 = scalar_lea.sflag [#allocation4], %s2472
          %s2474 = sand.u32 %s231, 1
          %s2475 = smul.addr %s2474, 128
          %s2476 = scalar_lea.vmem [#allocation11], %s2475
          %2477 = dma.done %s2473, 2048
        $region88: #{tpu_custom_call.1} parent=83 // pred_fallthru
          _
      $region84: #{tpu_custom_call.1} parent=5 // pred_fallthru
        _
    $region6: #{tpu_custom_call.1} parent=1 // loop_footer
      %s27 = sadd.s32 1, %s23
    $region7: #{tpu_custom_call.1} parent=1 // loop_footer_branch
      %22 = sbr.rel target = $region3
    $region8: #{tpu_custom_call.1} parent=1 // loop_exit
      _
    %2478 = vsyncpa [#allocation3], 1
    %s2479 = scalar_lea.sflag [#allocation3], 1
    %2480 = vsyncpa %s2479, 1
    %2481 = vsyncpa [#allocation6], 1
    %2482 = vsyncpa [#allocation9], 1
    %2483 = vsyncpa [#allocation4], 1
    %s2484 = scalar_lea.sflag [#allocation4], 1
    %2485 = vsyncpa %s2484, 1

</llo_original>
